<compile_context>
chip_gen: v7x
topology: tpu7x:2x2x1
jax: 0.10.0
libtpu: 0.0.40
codegen_flags: <defaults>
</compile_context>

<pallas_src>
import jax
import jax.numpy as jnp
import numpy as np
from jax.experimental import pallas as pl
from jax.experimental.pallas import tpu as pltpu

jax.config.update("jax_default_matmul_precision", "float32")


def decoder_lstm_kernel(x_ref, wih_ref, whh_ref, bg_ref, wout_ref, bo_ref,
                        out_ref, h_ref, c_ref):
    """Fused LSTM step + vocab-linear epilogue for one (t, vocab_tile) point."""
    t = pl.program_id(0)
    v = pl.program_id(1)
    H = h_ref.shape[-1]

    @pl.when(jnp.logical_and(t == 0, v == 0))
    def _init():
        h_ref[...] = jnp.zeros_like(h_ref)
        c_ref[...] = jnp.zeros_like(c_ref)

    # Recurrence update happens once per timestep (first vocab tile); the
    # remaining vocab tiles reuse the fresh h held in VMEM scratch.
    @pl.when(v == 0)
    def _cell():
        x_t = x_ref[0]                                         # (B, E)
        h_prev = h_ref[...]
        c_prev = c_ref[...]
        gates = (jnp.dot(x_t, wih_ref[...],
                         preferred_element_type=jnp.float32)
                 + jnp.dot(h_prev, whh_ref[...],
                           preferred_element_type=jnp.float32)
                 + bg_ref[...])                                # (B, 4H) i|f|g|o
        i_g = jax.nn.sigmoid(gates[:, 0 * H:1 * H])
        f_g = jax.nn.sigmoid(gates[:, 1 * H:2 * H])
        g_g = jnp.tanh(gates[:, 2 * H:3 * H])
        o_g = jax.nn.sigmoid(gates[:, 3 * H:4 * H])
        c_new = f_g * c_prev + i_g * g_g
        h_ref[...] = o_g * jnp.tanh(c_new)
        c_ref[...] = c_new

    # Vocab-linear epilogue on the current lane-dense vocab tile.
    logits = (jnp.dot(h_ref[...], wout_ref[...],
                      preferred_element_type=jnp.float32) + bo_ref[...])
    out_ref[0] = logits.astype(out_ref.dtype)


def decoder_rnn_forward(features, captions, w_embed, w_ih, w_hh, b_ih, b_hh,
                        w_out, b_out, *, tile_v=128):
    """Pallas forward matching DecoderRNN.forward (num_layers == 1)."""
    B, Tc = captions.shape
    E = w_embed.shape[1]
    H = w_hh.shape[1]
    V = w_out.shape[0]
    T = Tc                                   # features + embed(captions[:, :-1])

    # --- glue (plain JAX): embedding gather + feature prepend ---------------
    # TODO(synk): the token-row gather could be moved in-kernel with a manual
    # DMA gather; jnp.take is the recommended fallback for row gathers.
    emb = jnp.take(w_embed, captions[:, :-1], axis=0)          # (B, T-1, E)
    x = jnp.concatenate([features[:, None, :], emb], axis=1)   # (B, T, E)
    x_tbe = jnp.transpose(x, (1, 0, 2))                        # (T, B, E) time-major

    # Pre-transposed weights; combined gate bias.
    w_ih_t = w_ih.T                                            # (E, 4H)
    w_hh_t = w_hh.T                                            # (H, 4H)
    bg = (b_ih + b_hh).reshape(1, 4 * H)

    # Pad the vocab axis to a lane-dense multiple of tile_v; slice afterwards.
    n_v = pl.cdiv(V, tile_v)
    Vp = n_v * tile_v
    w_out_t = w_out.T                                          # (H, V)
    if Vp != V:
        w_out_t = jnp.pad(w_out_t, ((0, 0), (0, Vp - V)))
        b_out_p = jnp.pad(b_out, (0, Vp - V))
    else:
        b_out_p = b_out
    b_out_p = b_out_p.reshape(1, Vp)

    flops = int(T * (2 * B * E * 4 * H + 2 * B * H * 4 * H) + 2 * B * T * H * Vp)
    transcendentals = int(T * B * 5 * H)
    bytes_accessed = int(4 * (x_tbe.size + w_ih_t.size + w_hh_t.size + bg.size
                              + w_out_t.size + b_out_p.size + T * B * Vp))

    out = pl.pallas_call(
        decoder_lstm_kernel,
        out_shape=jax.ShapeDtypeStruct((T, B, Vp), jnp.float32),
        grid_spec=pltpu.PrefetchScalarGridSpec(
            num_scalar_prefetch=0,
            grid=(T, n_v),
            in_specs=[
                pl.BlockSpec((1, B, E), lambda t, v: (t, 0, 0)),   # x_t slab
                pl.BlockSpec((E, 4 * H), lambda t, v: (0, 0)),     # W_ih^T (resident)
                pl.BlockSpec((H, 4 * H), lambda t, v: (0, 0)),     # W_hh^T (resident)
                pl.BlockSpec((1, 4 * H), lambda t, v: (0, 0)),     # gate bias
                pl.BlockSpec((H, tile_v), lambda t, v: (0, v)),    # W_out^T tile
                pl.BlockSpec((1, tile_v), lambda t, v: (0, v)),    # out bias tile
            ],
            out_specs=pl.BlockSpec((1, B, tile_v), lambda t, v: (t, 0, v)),
            scratch_shapes=[pltpu.VMEM((B, H), jnp.float32),        # h state
                            pltpu.VMEM((B, H), jnp.float32)],       # c state
        ),
        compiler_params=pltpu.CompilerParams(
            dimension_semantics=("arbitrary", "arbitrary")),
        cost_estimate=pl.CostEstimate(flops=flops,
                                      transcendentals=transcendentals,
                                      bytes_accessed=bytes_accessed),
    )(x_tbe, w_ih_t, w_hh_t, bg, w_out_t, b_out_p)

    # Back to batch-first, drop vocab padding.
    return jnp.transpose(out, (1, 0, 2))[:, :, :V]


def reference(features, captions, w_embed, w_ih, w_hh, b_ih, b_hh, w_out, b_out):
    """Pure-JAX replica of DecoderRNN.forward (torch LSTM gate order i,f,g,o)."""
    H = w_hh.shape[1]
    emb = jnp.take(w_embed, captions[:, :-1], axis=0)
    x = jnp.concatenate([features[:, None, :], emb], axis=1)   # (B, T, E)
    B = x.shape[0]

    def step(carry, x_t):
        h, c = carry
        gates = x_t @ w_ih.T + b_ih + h @ w_hh.T + b_hh
        i = jax.nn.sigmoid(gates[:, 0 * H:1 * H])
        f = jax.nn.sigmoid(gates[:, 1 * H:2 * H])
        g = jnp.tanh(gates[:, 2 * H:3 * H])
        o = jax.nn.sigmoid(gates[:, 3 * H:4 * H])
        c = f * c + i * g
        h = o * jnp.tanh(c)
        return (h, c), h

    init = (jnp.zeros((B, H), jnp.float32), jnp.zeros((B, H), jnp.float32))
    _, hs = jax.lax.scan(step, init, jnp.transpose(x, (1, 0, 2)))
    hs = jnp.transpose(hs, (1, 0, 2))                           # (B, T, H)
    return hs @ w_out.T + b_out


if __name__ == "__main__":
    # TODO(synk): only num_layers=1 is implemented (the module default); a
    # deeper stack would just chain this kernel per layer.  beam_search is an
    # inference-time Python loop and is not part of forward().
    key = jax.random.PRNGKey(0)
    ks = jax.random.split(key, 9)

    B, Tc = 2, 8
    embed_size, hidden_size, vocab_size = 32, 32, 150   # Vp -> 256 (2 vocab tiles)

    features = jax.random.normal(ks[0], (B, embed_size), jnp.float32)
    captions = jax.random.randint(ks[1], (B, Tc), 0, vocab_size, jnp.int32)

    sc = 0.1
    w_embed = jax.random.normal(ks[2], (vocab_size, embed_size), jnp.float32) * sc
    w_ih = jax.random.normal(ks[3], (4 * hidden_size, embed_size), jnp.float32) * sc
    w_hh = jax.random.normal(ks[4], (4 * hidden_size, hidden_size), jnp.float32) * sc
    b_ih = jax.random.normal(ks[5], (4 * hidden_size,), jnp.float32) * sc
    b_hh = jax.random.normal(ks[6], (4 * hidden_size,), jnp.float32) * sc
    w_out = jax.random.normal(ks[7], (vocab_size, hidden_size), jnp.float32) * sc
    b_out = jax.random.normal(ks[8], (vocab_size,), jnp.float32) * sc

    out = jax.block_until_ready(decoder_rnn_forward(
        features, captions, w_embed, w_ih, w_hh, b_ih, b_hh, w_out, b_out))
    ref = jax.block_until_ready(reference(
        features, captions, w_embed, w_ih, w_hh, b_ih, b_hh, w_out, b_out))

    assert out.shape == (B, Tc, vocab_size), out.shape
    max_diff = float(np.max(np.abs(np.asarray(out) - np.asarray(ref))))
    assert np.allclose(np.asarray(out), np.asarray(ref), rtol=1e-2, atol=1e-2), \
        f"mismatch vs reference, max abs diff = {max_diff}"
    print("KERNEL_OK")
</pallas_src>

<mosaic_0001>
module attributes {stable_mosaic.version = 11 : i64} {
  func.func @decoder_lstm_kernel(%arg0: i32, %arg1: i32, %arg2: memref<1x2x32xf32, #tpu.memory_space<vmem>>, %arg3: memref<32x128xf32, #tpu.memory_space<vmem>>, %arg4: memref<32x128xf32, #tpu.memory_space<vmem>>, %arg5: memref<1x128xf32, #tpu.memory_space<vmem>>, %arg6: memref<32x128xf32, #tpu.memory_space<vmem>>, %arg7: memref<1x128xf32, #tpu.memory_space<vmem>>, %arg8: memref<1x2x128xf32, #tpu.memory_space<vmem>>, %arg9: memref<2x32xf32, #tpu.memory_space<vmem>>, %arg10: memref<2x32xf32, #tpu.memory_space<vmem>>) attributes {dimension_semantics = [#tpu.dimension_semantics<arbitrary>, #tpu.dimension_semantics<arbitrary>], iteration_bounds = array<i64: 8, 2>, scalar_prefetch = 0 : i64, scratch_operands = 2 : i64, tpu.core_type = #tpu.core_type<tc>, window_params = [{transform_indices = @transform_0, window_bounds = array<i64: 1, 2, 32>}, {pipeline_mode = #tpu.pipeline_mode<synchronous>, transform_indices = @transform_1, window_bounds = array<i64: 32, 128>}, {pipeline_mode = #tpu.pipeline_mode<synchronous>, transform_indices = @transform_2, window_bounds = array<i64: 32, 128>}, {pipeline_mode = #tpu.pipeline_mode<synchronous>, transform_indices = @transform_3, window_bounds = array<i64: 1, 128>}, {transform_indices = @transform_4, window_bounds = array<i64: 32, 128>}, {transform_indices = @transform_5, window_bounds = array<i64: 1, 128>}, {transform_indices = @transform_6, window_bounds = array<i64: 1, 2, 128>}]} {
    %c0_i32 = arith.constant 0 : i32
    %0 = arith.cmpi eq, %arg0, %c0_i32 : i32
    %c0_i32_0 = arith.constant 0 : i32
    %1 = arith.cmpi eq, %arg1, %c0_i32_0 : i32
    %2 = arith.andi %0, %1 : i1
    %3 = arith.extui %2 : i1 to i32
    %c0_i32_1 = arith.constant 0 : i32
    %4 = arith.cmpi ne, %3, %c0_i32_1 : i32
    scf.if %4 {
      %cst_12 = arith.constant 0.000000e+00 : f32
      %17 = vector.broadcast %cst_12 : f32 to vector<2x32xf32>
      %c0_13 = arith.constant 0 : index
      %c0_14 = arith.constant 0 : index
      %18 = vector.load %arg9[%c0_13, %c0_14] : memref<2x32xf32, #tpu.memory_space<vmem>>, vector<2x32xf32>
      tpu.vector_store %arg9[%c0_13, %c0_14], %17 {strides = array<i32>} : memref<2x32xf32, #tpu.memory_space<vmem>>, vector<2x32xf32>,
      %cst_15 = arith.constant 0.000000e+00 : f32
      %19 = vector.broadcast %cst_15 : f32 to vector<2x32xf32>
      %c0_16 = arith.constant 0 : index
      %c0_17 = arith.constant 0 : index
      %20 = vector.load %arg10[%c0_16, %c0_17] : memref<2x32xf32, #tpu.memory_space<vmem>>, vector<2x32xf32>
      tpu.vector_store %arg10[%c0_16, %c0_17], %19 {strides = array<i32>} : memref<2x32xf32, #tpu.memory_space<vmem>>, vector<2x32xf32>,
    } else {
    }
    %c0_i32_2 = arith.constant 0 : i32
    %5 = arith.cmpi eq, %arg1, %c0_i32_2 : i32
    %6 = arith.extui %5 : i1 to i32
    %c0_i32_3 = arith.constant 0 : i32
    %7 = arith.cmpi ne, %6, %c0_i32_3 : i32
    scf.if %7 {
      %c0_12 = arith.constant 0 : index
      %c0_13 = arith.constant 0 : index
      %c0_14 = arith.constant 0 : index
      %17 = vector.load %arg2[%c0_12, %c0_13, %c0_14] : memref<1x2x32xf32, #tpu.memory_space<vmem>>, vector<1x2x32xf32>
      %18 = vector.shape_cast %17 : vector<1x2x32xf32> to vector<2x32xf32>
      %c0_15 = arith.constant 0 : index
      %c0_16 = arith.constant 0 : index
      %19 = vector.load %arg9[%c0_15, %c0_16] : memref<2x32xf32, #tpu.memory_space<vmem>>, vector<2x32xf32>
      %c0_17 = arith.constant 0 : index
      %c0_18 = arith.constant 0 : index
      %20 = vector.load %arg10[%c0_17, %c0_18] : memref<2x32xf32, #tpu.memory_space<vmem>>, vector<2x32xf32>
      %c0_19 = arith.constant 0 : index
      %c0_20 = arith.constant 0 : index
      %21 = vector.load %arg3[%c0_19, %c0_20] : memref<32x128xf32, #tpu.memory_space<vmem>>, vector<32x128xf32>
      %cst_21 = arith.constant dense<0.000000e+00> : vector<2x128xf32>
      %22 = tpu.matmul %18, %21, %cst_21 {dimension_numbers = #tpu.dot_dimension_numbers<[1], [0], [0], [1], [0, 0, 1, 1], [], []>, precision = #tpu.contract_precision<fp32>} : vector<2x32xf32>, vector<32x128xf32>, vector<2x128xf32> -> vector<2x128xf32>
      %c0_22 = arith.constant 0 : index
      %c0_23 = arith.constant 0 : index
      %23 = vector.load %arg4[%c0_22, %c0_23] : memref<32x128xf32, #tpu.memory_space<vmem>>, vector<32x128xf32>
      %cst_24 = arith.constant dense<0.000000e+00> : vector<2x128xf32>
      %24 = tpu.matmul %19, %23, %cst_24 {dimension_numbers = #tpu.dot_dimension_numbers<[1], [0], [0], [1], [0, 0, 1, 1], [], []>, precision = #tpu.contract_precision<fp32>} : vector<2x32xf32>, vector<32x128xf32>, vector<2x128xf32> -> vector<2x128xf32>
      %25 = arith.addf %22, %24 : vector<2x128xf32>
      %c0_25 = arith.constant 0 : index
      %c0_26 = arith.constant 0 : index
      %26 = vector.load %arg5[%c0_25, %c0_26] : memref<1x128xf32, #tpu.memory_space<vmem>>, vector<1x128xf32>
      %27 = vector.broadcast %26 : vector<1x128xf32> to vector<2x128xf32>
      %28 = arith.addf %25, %27 : vector<2x128xf32>
      %29 = vector.extract_strided_slice %28 {offsets = [0, 0], sizes = [2, 32], strides = [1, 1]} : vector<2x128xf32> to vector<2x32xf32>
      %30 = arith.negf %29 : vector<2x32xf32>
      %31 = math.exp %30 : vector<2x32xf32>
      %cst_27 = arith.constant 1.000000e+00 : f32
      %32 = vector.broadcast %cst_27 : f32 to vector<2x32xf32>
      %33 = arith.addf %32, %31 : vector<2x32xf32>
      %34 = arith.divf %32, %33 : vector<2x32xf32>
      %35 = vector.extract_strided_slice %28 {offsets = [0, 32], sizes = [2, 32], strides = [1, 1]} : vector<2x128xf32> to vector<2x32xf32>
      %36 = arith.negf %35 : vector<2x32xf32>
      %37 = math.exp %36 : vector<2x32xf32>
      %cst_28 = arith.constant 1.000000e+00 : f32
      %38 = vector.broadcast %cst_28 : f32 to vector<2x32xf32>
      %39 = arith.addf %38, %37 : vector<2x32xf32>
      %40 = arith.divf %38, %39 : vector<2x32xf32>
      %41 = vector.extract_strided_slice %28 {offsets = [0, 64], sizes = [2, 32], strides = [1, 1]} : vector<2x128xf32> to vector<2x32xf32>
      %42 = math.tanh %41 : vector<2x32xf32>
      %43 = vector.extract_strided_slice %28 {offsets = [0, 96], sizes = [2, 32], strides = [1, 1]} : vector<2x128xf32> to vector<2x32xf32>
      %44 = arith.negf %43 : vector<2x32xf32>
      %45 = math.exp %44 : vector<2x32xf32>
      %cst_29 = arith.constant 1.000000e+00 : f32
      %46 = vector.broadcast %cst_29 : f32 to vector<2x32xf32>
      %47 = arith.addf %46, %45 : vector<2x32xf32>
      %48 = arith.divf %46, %47 : vector<2x32xf32>
      %49 = arith.mulf %40, %20 : vector<2x32xf32>
      %50 = arith.mulf %34, %42 : vector<2x32xf32>
      %51 = arith.addf %49, %50 : vector<2x32xf32>
      %52 = math.tanh %51 : vector<2x32xf32>
      %53 = arith.mulf %48, %52 : vector<2x32xf32>
      %c0_30 = arith.constant 0 : index
      %c0_31 = arith.constant 0 : index
      %54 = vector.load %arg9[%c0_30, %c0_31] : memref<2x32xf32, #tpu.memory_space<vmem>>, vector<2x32xf32>
      tpu.vector_store %arg9[%c0_30, %c0_31], %53 {strides = array<i32>} : memref<2x32xf32, #tpu.memory_space<vmem>>, vector<2x32xf32>,
      %c0_32 = arith.constant 0 : index
      %c0_33 = arith.constant 0 : index
      %55 = vector.load %arg10[%c0_32, %c0_33] : memref<2x32xf32, #tpu.memory_space<vmem>>, vector<2x32xf32>
      tpu.vector_store %arg10[%c0_32, %c0_33], %51 {strides = array<i32>} : memref<2x32xf32, #tpu.memory_space<vmem>>, vector<2x32xf32>,
    } else {
    }
    %c0 = arith.constant 0 : index
    %c0_4 = arith.constant 0 : index
    %8 = vector.load %arg9[%c0, %c0_4] : memref<2x32xf32, #tpu.memory_space<vmem>>, vector<2x32xf32>
    %c0_5 = arith.constant 0 : index
    %c0_6 = arith.constant 0 : index
    %9 = vector.load %arg6[%c0_5, %c0_6] : memref<32x128xf32, #tpu.memory_space<vmem>>, vector<32x128xf32>
    %cst = arith.constant dense<0.000000e+00> : vector<2x128xf32>
    %10 = tpu.matmul %8, %9, %cst {dimension_numbers = #tpu.dot_dimension_numbers<[1], [0], [0], [1], [0, 0, 1, 1], [], []>, precision = #tpu.contract_precision<fp32>} : vector<2x32xf32>, vector<32x128xf32>, vector<2x128xf32> -> vector<2x128xf32>
    %c0_7 = arith.constant 0 : index
    %c0_8 = arith.constant 0 : index
    %11 = vector.load %arg7[%c0_7, %c0_8] : memref<1x128xf32, #tpu.memory_space<vmem>>, vector<1x128xf32>
    %12 = vector.broadcast %11 : vector<1x128xf32> to vector<2x128xf32>
    %13 = arith.addf %10, %12 : vector<2x128xf32>
    %c0_9 = arith.constant 0 : index
    %c0_10 = arith.constant 0 : index
    %c0_11 = arith.constant 0 : index
    %14 = vector.load %arg8[%c0_9, %c0_10, %c0_11] : memref<1x2x128xf32, #tpu.memory_space<vmem>>, vector<1x2x128xf32>
    %15 = vector.shape_cast %14 : vector<1x2x128xf32> to vector<2x128xf32>
    %16 = vector.shape_cast %13 : vector<2x128xf32> to vector<1x2x128xf32>
    tpu.vector_store %arg8[%c0_9, %c0_10, %c0_11], %16 {strides = array<i32>} : memref<1x2x128xf32, #tpu.memory_space<vmem>>, vector<1x2x128xf32>,
    return
  }
  func.func @transform_0(%arg0: i32, %arg1: i32) -> (i32, i32, i32) {
    %c0_i32 = arith.constant 0 : i32
    %c0_i32_0 = arith.constant 0 : i32
    %c0_i32_1 = arith.constant 0 : i32
    return %arg0, %c0_i32, %c0_i32_0 : i32, i32, i32
  }
  func.func @transform_1(%arg0: i32, %arg1: i32) -> (i32, i32) {
    %c0_i32 = arith.constant 0 : i32
    %c0_i32_0 = arith.constant 0 : i32
    %c0_i32_1 = arith.constant 0 : i32
    return %c0_i32, %c0_i32_0 : i32, i32
  }
  func.func @transform_2(%arg0: i32, %arg1: i32) -> (i32, i32) {
    %c0_i32 = arith.constant 0 : i32
    %c0_i32_0 = arith.constant 0 : i32
    %c0_i32_1 = arith.constant 0 : i32
    return %c0_i32, %c0_i32_0 : i32, i32
  }
  func.func @transform_3(%arg0: i32, %arg1: i32) -> (i32, i32) {
    %c0_i32 = arith.constant 0 : i32
    %c0_i32_0 = arith.constant 0 : i32
    %c0_i32_1 = arith.constant 0 : i32
    return %c0_i32, %c0_i32_0 : i32, i32
  }
  func.func @transform_4(%arg0: i32, %arg1: i32) -> (i32, i32) {
    %c0_i32 = arith.constant 0 : i32
    %c0_i32_0 = arith.constant 0 : i32
    return %c0_i32, %arg1 : i32, i32
  }
  func.func @transform_5(%arg0: i32, %arg1: i32) -> (i32, i32) {
    %c0_i32 = arith.constant 0 : i32
    %c0_i32_0 = arith.constant 0 : i32
    return %c0_i32, %arg1 : i32, i32
  }
  func.func @transform_6(%arg0: i32, %arg1: i32) -> (i32, i32, i32) {
    %c0_i32 = arith.constant 0 : i32
    %c0_i32_0 = arith.constant 0 : i32
    return %arg0, %c0_i32, %arg1 : i32, i32, i32
  }
}

</mosaic_0001>

<llo_original>
// kernel: tpu_custom_call.1
$region0: #{tpu_custom_call.1}
  #allocation0 [shape = 'u32[]', space=smem, size = 0x4, offset = 0x4, fixed_abs, tag = 'smem constant byte address 0x4 - core index']
  #allocation1 [shape = 'u32[144,128]{1,0:T(1,128)}', space=vmem, size = 0x12000, scoped, tag = 'internal scratch']
  #allocation2 [shape = 'f32[2,32]{1,0:T(2,128)}', space=vmem, size = 0x400, scoped, tag = 'scratch operand']
  #allocation3 [shape = 'f32[2,32]{1,0:T(2,128)}', space=vmem, size = 0x400, scoped, tag = 'scratch operand']
  %s0 = inlined_call_operand.hbm [shape: f32[8,2,32], index: 0, kind: input, shape index: {}]
  %s1 = inlined_call_operand.hbm [shape: f32[32,128], index: 1, kind: input, shape index: {}]
  %s2 = inlined_call_operand.hbm [shape: f32[32,128], index: 2, kind: input, shape index: {}]
  %s3 = inlined_call_operand.vmem [shape: f32[1,128], index: 3, kind: input, shape index: {}]
  %s4 = inlined_call_operand.hbm [shape: f32[32,256], index: 4, kind: input, shape index: {}]
  %s5 = inlined_call_operand.vmem [shape: f32[1,256], index: 5, kind: input, shape index: {}]
  %s6 = inlined_call_operand.hbm [shape: f32[8,2,256], index: 6, kind: output, shape index: {}]
  %s7 = sld [smem:[#allocation0]]
  $region81: #{tpu_custom_call.1} parent=0
    _
  %s9 = ssub.s32 1, %s7
  %s10 = scalar_select 0, %s9, %s7
  $region1: #{tpu_custom_call.1} parent=0
    #allocation4 [shape = 'u8[2048]{0}', space=vmem, size = 0x800, scoped, tag = 'input window, operand 0']
    #allocation5 [shape = 's32[2]{0}', space=sflag, size = 0x8, scoped, tag = 'scoped memory for tpu_custom_call.1']
    #allocation6 [shape = 's32[2]{0}', space=sflag, size = 0x8, scoped, tag = 'scoped memory for tpu_custom_call.1']
    #allocation7 [shape = 'u8[16384]{0}', space=vmem, size = 0x4000, scoped, tag = 'input window, operand 1, single buffered']
    #allocation8 [shape = 's32[1]{0}', space=sflag, size = 0x4, scoped, tag = 'scoped memory for tpu_custom_call.1']
    #allocation9 [shape = 'u8[16384]{0}', space=vmem, size = 0x4000, scoped, tag = 'input window, operand 2, single buffered']
    #allocation10 [shape = 'u8[32768]{0}', space=vmem, size = 0x8000, scoped, tag = 'input window, operand 4']
    #allocation11 [shape = 's32[2]{0}', space=sflag, size = 0x8, scoped, tag = 'scoped memory for tpu_custom_call.1']
    #allocation12 [shape = 'u8[2048]{0}', space=vmem, size = 0x800, scoped, tag = 'output window, operand 0']
    %11 = vsyncpa [#allocation5], 0
    %s12 = scalar_lea.sflag [#allocation5], 1
    %13 = vsyncpa %s12, 0
    %14 = vsyncpa [#allocation8], 0
    %15 = vsyncpa [#allocation11], 0
    %s16 = scalar_lea.sflag [#allocation11], 1
    %17 = vsyncpa %s16, 0
    %18 = vsyncpa [#allocation6], 0
    %s19 = scalar_lea.sflag [#allocation6], 1
    %20 = vsyncpa %s19, 0
    loop: start=0, step=1, limit=18
    $region2: #{tpu_custom_call.1} parent=1 // loop_pre_header
      _
    $region3: #{tpu_custom_call.1} parent=1 // loop_header
      %s22 = sphi 0, %s26
      %p23 = scmp.ge.s32.totalorder %s22, 18
      %s29 = sphi 0, %s41
      %s30 = sphi 0, %s37
      %s31 = sphi 0, %s29
      %s32 = sphi 0, %s30
      %s33 = sphi 0, %s31
      %s34 = sphi 0, %s32
      %s44 = sphi 0, %s46
      %s47 = sphi 0, %s44
      %s48 = sphi 0, %s47
      %s64 = sphi 0, %s48
      %s68 = sphi 0, %s68
      %s70 = sphi 0, %s68
      %s71 = sphi 0, %s70
      %s85 = sphi 0, %s71
      %s89 = sphi 0, %s89
      %s91 = sphi 0, %s89
      %s92 = sphi 0, %s91
      %s106 = sphi 0, %s92
      %s110 = sphi 0, %s110
      %s112 = sphi 0, %s110
      %s113 = sphi 0, %s112
      %s127 = sphi 0, %s113
      %s133 = sphi 0, %s135
      %s136 = sphi 0, %s133
      %s137 = sphi 0, %s136
      %s153 = sphi 0, %s137
      %s159 = sphi 0, %s161
      %s162 = sphi 0, %s159
      %s163 = sphi 0, %s162
      %s179 = sphi 0, %s163
      %s187 = sphi 0, %s189
      %s190 = sphi 0, %s187
      %s191 = sphi 0, %s190
      %s207 = sphi 0, %s191
    $region4: #{tpu_custom_call.1} parent=1 // loop_header_branch
      %25 = sbr.rel (%p23) target = $region8
    $region5: #{tpu_custom_call.1} parent=1 // loop_body
      %s27 = ssub.s32 %s22, 1
      %s28 = ssub.s32 %s22, 2
      %s35 = sadd.s32 1, %s30
      %p36 = scmp.ge.s32.totalorder %s35, 2
      %s37 = scalar_select %p36, 0, %s35
      %s38 = sadd.s32 1, %s29
      %s39 = scalar_select %p36, %s38, %s29
      %p40 = scmp.ge.s32.totalorder %s39, 8
      %s41 = scalar_select %p40, 0, %s39
      %s42 = ssub.s32 %s29, %s41
      %p43 = scmp.eq.s32.totalorder %s42, 0
      %s45 = sadd.s32 %s44, 1
      %s46 = scalar_select %p43, %s44, %s45
      %p49 = pneg %p43
      %p50 = scmp.eq.s32.totalorder %s22, 15
      %p51 = por %p49, %p50
      %p52 = scmp.ne.s32.totalorder %s44, %s47
      %p53 = scmp.eq.s32.totalorder %s22, 0
      %p54 = por %p52, %p53
      %p55 = scmp.ne.s32.totalorder %s44, %s47
      %p56 = scmp.eq.s32.totalorder %s27, 15
      %p57 = por %p55, %p56
      %p58 = scmp.ne.s32.totalorder %s47, %s48
      %p59 = scmp.eq.s32.totalorder %s27, 0
      %p60 = por %p58, %p59
      %p61 = scmp.ne.s32.totalorder %s47, %s48
      %p62 = scmp.eq.s32.totalorder %s28, 15
      %p63 = por %p61, %p62
      %p65 = scmp.ne.s32.totalorder %s48, %s64
      %p66 = scmp.eq.s32.totalorder %s28, 0
      %p67 = por %p65, %p66
      %s69 = sadd.s32 %s68, 1
      %p72 = scmp.eq.s32.totalorder %s22, 15
      %p73 = scmp.ne.s32.totalorder %s68, %s70
      %p74 = scmp.eq.s32.totalorder %s22, 0
      %p75 = por %p73, %p74
      %p76 = scmp.ne.s32.totalorder %s68, %s70
      %p77 = scmp.eq.s32.totalorder %s27, 15
      %p78 = por %p76, %p77
      %p79 = scmp.ne.s32.totalorder %s70, %s71
      %p80 = scmp.eq.s32.totalorder %s27, 0
      %p81 = por %p79, %p80
      %p82 = scmp.ne.s32.totalorder %s70, %s71
      %p83 = scmp.eq.s32.totalorder %s28, 15
      %p84 = por %p82, %p83
      %p86 = scmp.ne.s32.totalorder %s71, %s85
      %p87 = scmp.eq.s32.totalorder %s28, 0
      %p88 = por %p86, %p87
      %s90 = sadd.s32 %s89, 1
      %p93 = scmp.eq.s32.totalorder %s22, 15
      %p94 = scmp.ne.s32.totalorder %s89, %s91
      %p95 = scmp.eq.s32.totalorder %s22, 0
      %p96 = por %p94, %p95
      %p97 = scmp.ne.s32.totalorder %s89, %s91
      %p98 = scmp.eq.s32.totalorder %s27, 15
      %p99 = por %p97, %p98
      %p100 = scmp.ne.s32.totalorder %s91, %s92
      %p101 = scmp.eq.s32.totalorder %s27, 0
      %p102 = por %p100, %p101
      %p103 = scmp.ne.s32.totalorder %s91, %s92
      %p104 = scmp.eq.s32.totalorder %s28, 15
      %p105 = por %p103, %p104
      %p107 = scmp.ne.s32.totalorder %s92, %s106
      %p108 = scmp.eq.s32.totalorder %s28, 0
      %p109 = por %p107, %p108
      %s111 = sadd.s32 %s110, 1
      %p114 = scmp.eq.s32.totalorder %s22, 15
      %p115 = scmp.ne.s32.totalorder %s110, %s112
      %p116 = scmp.eq.s32.totalorder %s22, 0
      %p117 = por %p115, %p116
      %p118 = scmp.ne.s32.totalorder %s110, %s112
      %p119 = scmp.eq.s32.totalorder %s27, 15
      %p120 = por %p118, %p119
      %p121 = scmp.ne.s32.totalorder %s112, %s113
      %p122 = scmp.eq.s32.totalorder %s27, 0
      %p123 = por %p121, %p122
      %p124 = scmp.ne.s32.totalorder %s112, %s113
      %p125 = scmp.eq.s32.totalorder %s28, 15
      %p126 = por %p124, %p125
      %p128 = scmp.ne.s32.totalorder %s113, %s127
      %p129 = scmp.eq.s32.totalorder %s28, 0
      %p130 = por %p128, %p129
      %s131 = ssub.s32 %s30, %s37
      %p132 = scmp.eq.s32.totalorder %s131, 0
      %s134 = sadd.s32 %s133, 1
      %s135 = scalar_select %p132, %s133, %s134
      %p138 = pneg %p132
      %p139 = scmp.eq.s32.totalorder %s22, 15
      %p140 = por %p138, %p139
      %p141 = scmp.ne.s32.totalorder %s133, %s136
      %p142 = scmp.eq.s32.totalorder %s22, 0
      %p143 = por %p141, %p142
      %p144 = scmp.ne.s32.totalorder %s133, %s136
      %p145 = scmp.eq.s32.totalorder %s27, 15
      %p146 = por %p144, %p145
      %p147 = scmp.ne.s32.totalorder %s136, %s137
      %p148 = scmp.eq.s32.totalorder %s27, 0
      %p149 = por %p147, %p148
      %p150 = scmp.ne.s32.totalorder %s136, %s137
      %p151 = scmp.eq.s32.totalorder %s28, 15
      %p152 = por %p150, %p151
      %p154 = scmp.ne.s32.totalorder %s137, %s153
      %p155 = scmp.eq.s32.totalorder %s28, 0
      %p156 = por %p154, %p155
      %s157 = ssub.s32 %s30, %s37
      %p158 = scmp.eq.s32.totalorder %s157, 0
      %s160 = sadd.s32 %s159, 1
      %s161 = scalar_select %p158, %s159, %s160
      %p164 = pneg %p158
      %p165 = scmp.eq.s32.totalorder %s22, 15
      %p166 = por %p164, %p165
      %p167 = scmp.ne.s32.totalorder %s159, %s162
      %p168 = scmp.eq.s32.totalorder %s22, 0
      %p169 = por %p167, %p168
      %p170 = scmp.ne.s32.totalorder %s159, %s162
      %p171 = scmp.eq.s32.totalorder %s27, 15
      %p172 = por %p170, %p171
      %p173 = scmp.ne.s32.totalorder %s162, %s163
      %p174 = scmp.eq.s32.totalorder %s27, 0
      %p175 = por %p173, %p174
      %p176 = scmp.ne.s32.totalorder %s162, %s163
      %p177 = scmp.eq.s32.totalorder %s28, 15
      %p178 = por %p176, %p177
      %p180 = scmp.ne.s32.totalorder %s163, %s179
      %p181 = scmp.eq.s32.totalorder %s28, 0
      %p182 = por %p180, %p181
      %s183 = ssub.s32 %s29, %s41
      %s184 = ssub.s32 %s30, %s37
      %s185 = sor.u32 %s183, %s184
      %p186 = scmp.eq.s32.totalorder %s185, 0
      %s188 = sadd.s32 %s187, 1
      %s189 = scalar_select %p186, %s187, %s188
      %p192 = pneg %p186
      %p193 = scmp.eq.s32.totalorder %s22, 15
      %p194 = por %p192, %p193
      %p195 = scmp.ne.s32.totalorder %s187, %s190
      %p196 = scmp.eq.s32.totalorder %s22, 0
      %p197 = por %p195, %p196
      %p198 = scmp.ne.s32.totalorder %s187, %s190
      %p199 = scmp.eq.s32.totalorder %s27, 15
      %p200 = por %p198, %p199
      %p201 = scmp.ne.s32.totalorder %s190, %s191
      %p202 = scmp.eq.s32.totalorder %s27, 0
      %p203 = por %p201, %p202
      %p204 = scmp.ne.s32.totalorder %s190, %s191
      %p205 = scmp.eq.s32.totalorder %s28, 15
      %p206 = por %p204, %p205
      %p208 = scmp.ne.s32.totalorder %s191, %s207
      %p209 = scmp.eq.s32.totalorder %s28, 0
      %p210 = por %p208, %p209
      %p211 = scmp.le.s32.totalorder 1, %s22
      %p212 = scmp.lt.s32.totalorder %s22, 17
      %p213 = pnand %p211, %p212
      %p214 = pneg %p213
      // Predicated region
      $region9: #{tpu_custom_call.1} parent=5 // pred_check
        _
      $region10: #{tpu_custom_call.1} parent=5 // pred_check_branch
        %216 = sbr.rel (%p213) target = $region12
      $region11: #{tpu_custom_call.1} parent=5 // pred_region
        %s217 = ssub.s32 %s22, 1
        // Predicated region
        $region13: #{tpu_custom_call.1} parent=11 // pred_check
          %p218 = pneg %p81
        $region14: #{tpu_custom_call.1} parent=11 // pred_check_branch
          %220 = sbr.rel (%p218) target = $region16
        $region15: #{tpu_custom_call.1} parent=11 // pred_region
          %s222 = ssub.s32 512, 512
          %223 = vsyncadd [#allocation8], %s222
          %s224 = sshll.u32 [#allocation7], 4
          %s225 = int_to_ptr.vmem [resolvable:$true] %s224
          %230 = dma.hbm_to_vmem [thread:$0]  %s1, 512, %s225, [#allocation8], 128, 128, 8
        $region16: #{tpu_custom_call.1} parent=11 // pred_fallthru
          _
        // Predicated region
        $region17: #{tpu_custom_call.1} parent=11 // pred_check
          %p231 = pneg %p102
        $region18: #{tpu_custom_call.1} parent=11 // pred_check_branch
          %233 = sbr.rel (%p231) target = $region20
        $region19: #{tpu_custom_call.1} parent=11 // pred_region
          %s235 = ssub.s32 512, 512
          %236 = vsyncadd [#allocation8], %s235
          %s237 = sshll.u32 [#allocation9], 4
          %s238 = int_to_ptr.vmem [resolvable:$true] %s237
          %243 = dma.hbm_to_vmem [thread:$0]  %s2, 512, %s238, [#allocation8], 128, 128, 8
        $region20: #{tpu_custom_call.1} parent=11 // pred_fallthru
          _
        // Predicated region
        $region21: #{tpu_custom_call.1} parent=11 // pred_check
          %p244 = pneg %p123
        $region22: #{tpu_custom_call.1} parent=11 // pred_check_branch
          %246 = sbr.rel (%p244) target = $region24
        $region23: #{tpu_custom_call.1} parent=11 // pred_region
          _
        $region24: #{tpu_custom_call.1} parent=11 // pred_fallthru
          _
      $region12: #{tpu_custom_call.1} parent=5 // pred_fallthru
        _
      %p247 = scmp.lt.s32.totalorder %s22, 16
      // Predicated region
      $region25: #{tpu_custom_call.1} parent=5 // pred_check
        %p248 = pneg %p247
      $region26: #{tpu_custom_call.1} parent=5 // pred_check_branch
        %250 = sbr.rel (%p248) target = $region28
      $region27: #{tpu_custom_call.1} parent=5 // pred_region
        // Predicated region
        $region29: #{tpu_custom_call.1} parent=27 // pred_check
          %p251 = pneg %p54
        $region30: #{tpu_custom_call.1} parent=27 // pred_check_branch
          %253 = sbr.rel (%p251) target = $region32
        $region31: #{tpu_custom_call.1} parent=27 // pred_region
          %s254 = sand.u32 %s44, 1
          %s255 = scalar_lea.sflag [#allocation5], %s254
          %s256 = sand.u32 %s44, 1
          %s257 = smul.addr %s256, 2
          %s258 = scalar_lea.vmem [#allocation4], %s257
          %s260 = ssub.s32 32, 32
          %261 = vsyncadd %s255, %s260
          %s262 = smul.addr %s29, 32
          %s263 = scalar_lea.hbm %s0, %s262
          %s265 = sshll.u32 %s258, 4
          %s266 = int_to_ptr.vmem [resolvable:$true] %s265
          %268 = dma.hbm_to_vmem [thread:$0]  %s263, 32, %s266, %s255
        $region32: #{tpu_custom_call.1} parent=27 // pred_fallthru
          _
        // Predicated region
        $region33: #{tpu_custom_call.1} parent=27 // pred_check
          %p269 = pneg %p143
        $region34: #{tpu_custom_call.1} parent=27 // pred_check_branch
          %271 = sbr.rel (%p269) target = $region36
        $region35: #{tpu_custom_call.1} parent=27 // pred_region
          %s272 = sand.u32 %s133, 1
          %s273 = scalar_lea.sflag [#allocation11], %s272
          %s274 = sand.u32 %s133, 1
          %s275 = smul.addr %s274, 32
          %s276 = scalar_lea.vmem [#allocation10], %s275
          %s278 = ssub.s32 512, 512
          %279 = vsyncadd %s273, %s278
          %s280 = smul.addr %s30, 128
          %s281 = scalar_lea.hbm %s4, %s280
          %s282 = sshll.u32 %s276, 4
          %s283 = int_to_ptr.vmem [resolvable:$true] %s282
          %288 = dma.hbm_to_vmem [thread:$0]  %s281, 512, %s283, %s273, 256, 128, 8
        $region36: #{tpu_custom_call.1} parent=27 // pred_fallthru
          _
        // Predicated region
        $region37: #{tpu_custom_call.1} parent=27 // pred_check
          %p289 = pneg %p169
        $region38: #{tpu_custom_call.1} parent=27 // pred_check_branch
          %291 = sbr.rel (%p289) target = $region40
        $region39: #{tpu_custom_call.1} parent=27 // pred_region
          %p292 = scmp.lt.s32.totalorder %s30, 1
          %s293 = scalar_select %p292, %s30, 1
          %s294 = scalar_lea.vmem %s5, %s293
        $region40: #{tpu_custom_call.1} parent=27 // pred_fallthru
          _
      $region28: #{tpu_custom_call.1} parent=5 // pred_fallthru
        _
      %p295 = scmp.le.s32.totalorder 1, %s22
      %p296 = scmp.lt.s32.totalorder %s22, 17
      %p297 = pnand %p295, %p296
      %p298 = pneg %p297
      // Predicated region
      $region41: #{tpu_custom_call.1} parent=5 // pred_check
        _
      $region42: #{tpu_custom_call.1} parent=5 // pred_check_branch
        %300 = sbr.rel (%p297) target = $region44
      $region43: #{tpu_custom_call.1} parent=5 // pred_region
        %s301 = ssub.s32 %s22, 1
        %s302 = sand.u32 %s47, 1
        %s303 = scalar_lea.sflag [#allocation5], %s302
        %s304 = sand.u32 %s47, 1
        %s305 = smul.addr %s304, 2
        %s306 = scalar_lea.vmem [#allocation4], %s305
        // Predicated region
        $region45: #{tpu_custom_call.1} parent=43 // pred_check
          %p307 = pneg %p60
        $region46: #{tpu_custom_call.1} parent=43 // pred_check_branch
          %309 = sbr.rel (%p307) target = $region48
        $region47: #{tpu_custom_call.1} parent=43 // pred_region
          %310 = dma.done %s303, 32
        $region48: #{tpu_custom_call.1} parent=43 // pred_fallthru
          _
        // Predicated region
        $region49: #{tpu_custom_call.1} parent=43 // pred_check
          %p311 = pneg %p81
        $region50: #{tpu_custom_call.1} parent=43 // pred_check_branch
          %313 = sbr.rel (%p311) target = $region52
        $region51: #{tpu_custom_call.1} parent=43 // pred_region
          %314 = dma.done [#allocation8], 512
        $region52: #{tpu_custom_call.1} parent=43 // pred_fallthru
          _
        // Predicated region
        $region53: #{tpu_custom_call.1} parent=43 // pred_check
          %p315 = pneg %p102
        $region54: #{tpu_custom_call.1} parent=43 // pred_check_branch
          %317 = sbr.rel (%p315) target = $region56
        $region55: #{tpu_custom_call.1} parent=43 // pred_region
          %318 = dma.done [#allocation8], 512
        $region56: #{tpu_custom_call.1} parent=43 // pred_fallthru
          _
        %s319 = sand.u32 %s136, 1
        %s320 = scalar_lea.sflag [#allocation11], %s319
        %s321 = sand.u32 %s136, 1
        %s322 = smul.addr %s321, 32
        %s323 = scalar_lea.vmem [#allocation10], %s322
        // Predicated region
        $region57: #{tpu_custom_call.1} parent=43 // pred_check
          %p324 = pneg %p149
        $region58: #{tpu_custom_call.1} parent=43 // pred_check_branch
          %326 = sbr.rel (%p324) target = $region60
        $region59: #{tpu_custom_call.1} parent=43 // pred_region
          %327 = dma.done %s320, 512
        $region60: #{tpu_custom_call.1} parent=43 // pred_fallthru
          _
        %s328 = sand.u32 %s47, 1
        %s329 = scalar_lea.sflag [#allocation5], %s328
        %s330 = sand.u32 %s47, 1
        %s331 = smul.addr %s330, 2
        %s332 = scalar_lea.vmem [#allocation4], %s331
        %p333 = pneg %p60
        %p334 = pneg %p57
        %p335 = pneg %p81
        %p336 = pneg %p78
        %p337 = pneg %p102
        %p338 = pneg %p99
        %p339 = pneg %p123
        %p340 = pneg %p120
        %s341 = sand.u32 %s136, 1
        %s342 = scalar_lea.sflag [#allocation11], %s341
        %s343 = sand.u32 %s136, 1
        %s344 = smul.addr %s343, 32
        %s345 = scalar_lea.vmem [#allocation10], %s344
        %p346 = pneg %p149
        %p347 = pneg %p146
        %p348 = scmp.lt.s32.totalorder %s32, 1
        %s349 = scalar_select %p348, %s32, 1
        %s350 = scalar_lea.vmem %s5, %s349
        %p351 = pneg %p175
        %p352 = pneg %p172
        %p353 = pneg %p203
        %p354 = pneg %p200
        %s355 = sand.u32 %s190, 1
        %s356 = scalar_lea.sflag [#allocation6], %s355
        %s357 = sand.u32 %s190, 1
        %s358 = smul.addr %s357, 2
        %s359 = scalar_lea.vmem [#allocation12], %s358
        %p360 = scmp.lt.s32.totalorder %s32, 1
        %s361 = scalar_select %p360, %s32, 1
        %s362 = scalar_lea.vmem %s5, %s361
        %p363 = scmp.eq.s32.totalorder %s31, 0
        %p364 = scmp.eq.s32.totalorder %s32, 0
        %p365 = pnand %p363, %p364
        %p366 = pneg %p365
        // Predicated region
        $region61: #{tpu_custom_call.1} parent=43 // pred_check
          _
        $region62: #{tpu_custom_call.1} parent=43 // pred_check_branch
          %368 = sbr.rel (%p365) target = $region64
        $region63: #{tpu_custom_call.1} parent=43 // pred_region
          %vm369 = vcmask 254976
          %370 = vst.msk [vmem:[#allocation2] sm:$0x3] %vm369, 0.0
          %371 = vst.msk [vmem:[#allocation3] sm:$0x3] %vm369, 0.0
        $region64: #{tpu_custom_call.1} parent=43 // pred_fallthru
          _
        // Predicated region
        $region65: #{tpu_custom_call.1} parent=43 // pred_check
          %p372 = pneg %p364
        $region66: #{tpu_custom_call.1} parent=43 // pred_check_branch
          %374 = sbr.rel (%p372) target = $region68
        $region67: #{tpu_custom_call.1} parent=43 // pred_region
          %v375 = vld [vmem:[%s306] sm:$0x3]
          %v376 = vld [vmem:[#allocation2] sm:$0x3]
          %v377 = vld [vmem:[#allocation3] sm:$0x3]
          %v378 = vld [vmem:[#allocation7] sm:$0xff]
          %v379 = vld [vmem:[#allocation7 + $0x8] sm:$0xff]
          %v380 = vld [vmem:[#allocation7 + $0x10] sm:$0xff]
          %v381 = vld [vmem:[#allocation7 + $0x18] sm:$0xff]
          %v382 = vld [vmem:[#allocation9] sm:$0xff]
          %v383 = vld [vmem:[#allocation9 + $0x8] sm:$0xff]
          %v384 = vld [vmem:[#allocation9 + $0x10] sm:$0xff]
          %v385 = vld [vmem:[#allocation9 + $0x18] sm:$0xff]
          %vm386 = vcmask 261120
          %v388 = vsel %vm386, %v376, 0
          %390 = vmatprep.subr.mxu0 0.0
          %v391 = vand.u32 %v382, 4294901760
          %392 = vmatpush1.msra.mxu0 %v391
          %393 = vmatprep.subr.mxu0 0.0
          %v394 = vand.u32 %v383, 4294901760
          %395 = vmatpush1.msra.mxu0 %v394
          %396 = vmatprep.subr.mxu0 0.0
          %v397 = vand.u32 %v384, 4294901760
          %398 = vmatpush1.msra.mxu0 %v397
          %399 = vmatprep.subr.mxu0 0.0
          %v400 = vand.u32 %v385, 4294901760
          %401 = vmatpush1.msra.mxu0 %v400
          %402 = vmatprep.subr.mxu0 0.0
          %403 = vmatpush1.msra.mxu0 0.0
          %404 = vmatprep.subr.mxu0 0.0
          %405 = vmatpush1.msra.mxu0 0.0
          %406 = vmatprep.subr.mxu0 0.0
          %407 = vmatpush1.msra.mxu0 0.0
          %408 = vmatprep.subr.mxu0 0.0
          %409 = vmatpush1.msra.mxu0 0.0
          %410 = vmatprep.subr.mxu0 0.0
          %411 = vmatpush1.msra.mxu0 0.0
          %412 = vmatprep.subr.mxu0 0.0
          %413 = vmatpush1.msra.mxu0 0.0
          %414 = vmatprep.subr.mxu0 0.0
          %415 = vmatpush1.msra.mxu0 0.0
          %416 = vmatprep.subr.mxu0 0.0
          %417 = vmatpush1.msra.mxu0 0.0
          %418 = vmatprep.subr.mxu0 0.0
          %419 = vmatpush1.msra.mxu0 0.0
          %420 = vmatprep.subr.mxu0 0.0
          %421 = vmatpush1.msra.mxu0 0.0
          %422 = vmatprep.subr.mxu0 0.0
          %423 = vmatpush1.msra.mxu0 0.0
          %424 = vmatprep.subr.mxu0 0.0
          %425 = vmatpush1.msra.mxu0 0.0
          %426 = vmatprep.subr.mxu0 0.0
          %427 = vmatpush1.msra.mxu0 0.0
          %428 = vmatprep.subr.mxu0 0.0
          %429 = vmatpush1.msra.mxu0 0.0
          %430 = vmatprep.subr.mxu0 0.0
          %431 = vmatpush1.msra.mxu0 0.0
          %432 = vmatprep.subr.mxu0 0.0
          %433 = vmatpush1.msra.mxu0 0.0
          %434 = vmatprep.subr.mxu0 0.0
          %435 = vmatpush1.msra.mxu0 0.0
          %436 = vmatprep.subr.mxu0 0.0
          %437 = vmatpush1.msra.mxu0 0.0
          %438 = vmatprep.subr.mxu0 0.0
          %439 = vmatpush1.msra.mxu0 0.0
          %440 = vmatprep.subr.mxu0 0.0
          %441 = vmatpush1.msra.mxu0 0.0
          %442 = vmatprep.subr.mxu0 0.0
          %443 = vmatpush1.msra.mxu0 0.0
          %444 = vmatprep.subr.mxu0 0.0
          %445 = vmatpush1.msra.mxu0 0.0
          %446 = vmatprep.subr.mxu0 0.0
          %447 = vmatpush1.msra.mxu0 0.0
          %448 = vmatprep.subr.mxu0 0.0
          %449 = vmatpush1.msra.mxu0 0.0
          %450 = vmatprep.subr.mxu0 0.0
          %451 = vmatpush1.msra.mxu0 0.0
          %452 = vmatprep.subr.mxu0 0.0
          %453 = vmatpush1.msra.mxu0 0.0
          %454 = vmatprep.subr.mxu0 0.0
          %455 = vmatpush1.msra.mxu0 0.0
          %456 = vmatprep.subr.mxu0 0.0
          %457 = vmatpush1.msra.mxu0 0.0
          %458 = vmatprep.mubr.f32.mxu0 0.0
          %v459 = vand.u32 %v388, 4294901760
          %v460 = vsub.f32 %v388, %v459
          %v461 = vand.u32 %v460, 4294901760
          %v462 = vsub.f32 %v460, %v461
          %v463 = vand.u32 %v462, 4294901760
          %464 = vmatmul.mubr.f32.gmra.mrb[0].mxu0 %v463
          %v465 = vpop.f32.mrb[0].mxu0
          %v466 = vadd.f32 0.0, %v465
          %v467 = vpop.f32.mrb[0].mxu0
          %468 = vdwg.mxu0
          %469 = vmatprep.subr.mxu0 0.0
          %v470 = vand.u32 %v382, 4294901760
          %v471 = vsub.f32 %v382, %v470
          %v472 = vand.u32 %v471, 4294901760
          %v473 = vsub.f32 %v471, %v472
          %v474 = vand.u32 %v473, 4294901760
          %475 = vmatpush1.msra.mxu0 %v474
          %476 = vmatprep.subr.mxu0 0.0
          %v477 = vand.u32 %v383, 4294901760
          %v478 = vsub.f32 %v383, %v477
          %v479 = vand.u32 %v478, 4294901760
          %v480 = vsub.f32 %v478, %v479
          %v481 = vand.u32 %v480, 4294901760
          %482 = vmatpush1.msra.mxu0 %v481
          %483 = vmatprep.subr.mxu0 0.0
          %v484 = vand.u32 %v384, 4294901760
          %v485 = vsub.f32 %v384, %v484
          %v486 = vand.u32 %v485, 4294901760
          %v487 = vsub.f32 %v485, %v486
          %v488 = vand.u32 %v487, 4294901760
          %489 = vmatpush1.msra.mxu0 %v488
          %490 = vmatprep.subr.mxu0 0.0
          %v491 = vand.u32 %v385, 4294901760
          %v492 = vsub.f32 %v385, %v491
          %v493 = vand.u32 %v492, 4294901760
          %v494 = vsub.f32 %v492, %v493
          %v495 = vand.u32 %v494, 4294901760
          %496 = vmatpush1.msra.mxu0 %v495
          %497 = vmatprep.subr.mxu0 0.0
          %498 = vmatpush1.msra.mxu0 0.0
          %499 = vmatprep.subr.mxu0 0.0
          %500 = vmatpush1.msra.mxu0 0.0
          %501 = vmatprep.subr.mxu0 0.0
          %502 = vmatpush1.msra.mxu0 0.0
          %503 = vmatprep.subr.mxu0 0.0
          %504 = vmatpush1.msra.mxu0 0.0
          %505 = vmatprep.subr.mxu0 0.0
          %506 = vmatpush1.msra.mxu0 0.0
          %507 = vmatprep.subr.mxu0 0.0
          %508 = vmatpush1.msra.mxu0 0.0
          %509 = vmatprep.subr.mxu0 0.0
          %510 = vmatpush1.msra.mxu0 0.0
          %511 = vmatprep.subr.mxu0 0.0
          %512 = vmatpush1.msra.mxu0 0.0
          %513 = vmatprep.subr.mxu0 0.0
          %514 = vmatpush1.msra.mxu0 0.0
          %515 = vmatprep.subr.mxu0 0.0
          %516 = vmatpush1.msra.mxu0 0.0
          %517 = vmatprep.subr.mxu0 0.0
          %518 = vmatpush1.msra.mxu0 0.0
          %519 = vmatprep.subr.mxu0 0.0
          %520 = vmatpush1.msra.mxu0 0.0
          %521 = vmatprep.subr.mxu0 0.0
          %522 = vmatpush1.msra.mxu0 0.0
          %523 = vmatprep.subr.mxu0 0.0
          %524 = vmatpush1.msra.mxu0 0.0
          %525 = vmatprep.subr.mxu0 0.0
          %526 = vmatpush1.msra.mxu0 0.0
          %527 = vmatprep.subr.mxu0 0.0
          %528 = vmatpush1.msra.mxu0 0.0
          %529 = vmatprep.subr.mxu0 0.0
          %530 = vmatpush1.msra.mxu0 0.0
          %531 = vmatprep.subr.mxu0 0.0
          %532 = vmatpush1.msra.mxu0 0.0
          %533 = vmatprep.subr.mxu0 0.0
          %534 = vmatpush1.msra.mxu0 0.0
          %535 = vmatprep.subr.mxu0 0.0
          %536 = vmatpush1.msra.mxu0 0.0
          %537 = vmatprep.subr.mxu0 0.0
          %538 = vmatpush1.msra.mxu0 0.0
          %539 = vmatprep.subr.mxu0 0.0
          %540 = vmatpush1.msra.mxu0 0.0
          %541 = vmatprep.subr.mxu0 0.0
          %542 = vmatpush1.msra.mxu0 0.0
          %543 = vmatprep.subr.mxu0 0.0
          %544 = vmatpush1.msra.mxu0 0.0
          %545 = vmatprep.subr.mxu0 0.0
          %546 = vmatpush1.msra.mxu0 0.0
          %547 = vmatprep.subr.mxu0 0.0
          %548 = vmatpush1.msra.mxu0 0.0
          %549 = vmatprep.subr.mxu0 0.0
          %550 = vmatpush1.msra.mxu0 0.0
          %551 = vmatprep.subr.mxu0 0.0
          %552 = vmatpush1.msra.mxu0 0.0
          %553 = vmatprep.mubr.f32.mxu0 0.0
          %v554 = vand.u32 %v388, 4294901760
          %555 = vmatmul.mubr.f32.gmra.mrb[0].mxu0 %v554
          %v556 = vpop.f32.mrb[0].mxu0
          %v557 = vadd.f32 %v466, %v556
          %v558 = vpop.f32.mrb[0].mxu0
          %559 = vdwg.mxu0
          %560 = vmatprep.subr.mxu0 0.0
          %v561 = vand.u32 %v382, 4294901760
          %v562 = vsub.f32 %v382, %v561
          %563 = vmatpush1.msra.mxu0 %v562
          %564 = vmatprep.subr.mxu0 0.0
          %v565 = vand.u32 %v383, 4294901760
          %v566 = vsub.f32 %v383, %v565
          %567 = vmatpush1.msra.mxu0 %v566
          %568 = vmatprep.subr.mxu0 0.0
          %v569 = vand.u32 %v384, 4294901760
          %v570 = vsub.f32 %v384, %v569
          %571 = vmatpush1.msra.mxu0 %v570
          %572 = vmatprep.subr.mxu0 0.0
          %v573 = vand.u32 %v385, 4294901760
          %v574 = vsub.f32 %v385, %v573
          %575 = vmatpush1.msra.mxu0 %v574
          %576 = vmatprep.subr.mxu0 0.0
          %577 = vmatpush1.msra.mxu0 0.0
          %578 = vmatprep.subr.mxu0 0.0
          %579 = vmatpush1.msra.mxu0 0.0
          %580 = vmatprep.subr.mxu0 0.0
          %581 = vmatpush1.msra.mxu0 0.0
          %582 = vmatprep.subr.mxu0 0.0
          %583 = vmatpush1.msra.mxu0 0.0
          %584 = vmatprep.subr.mxu0 0.0
          %585 = vmatpush1.msra.mxu0 0.0
          %586 = vmatprep.subr.mxu0 0.0
          %587 = vmatpush1.msra.mxu0 0.0
          %588 = vmatprep.subr.mxu0 0.0
          %589 = vmatpush1.msra.mxu0 0.0
          %590 = vmatprep.subr.mxu0 0.0
          %591 = vmatpush1.msra.mxu0 0.0
          %592 = vmatprep.subr.mxu0 0.0
          %593 = vmatpush1.msra.mxu0 0.0
          %594 = vmatprep.subr.mxu0 0.0
          %595 = vmatpush1.msra.mxu0 0.0
          %596 = vmatprep.subr.mxu0 0.0
          %597 = vmatpush1.msra.mxu0 0.0
          %598 = vmatprep.subr.mxu0 0.0
          %599 = vmatpush1.msra.mxu0 0.0
          %600 = vmatprep.subr.mxu0 0.0
          %601 = vmatpush1.msra.mxu0 0.0
          %602 = vmatprep.subr.mxu0 0.0
          %603 = vmatpush1.msra.mxu0 0.0
          %604 = vmatprep.subr.mxu0 0.0
          %605 = vmatpush1.msra.mxu0 0.0
          %606 = vmatprep.subr.mxu0 0.0
          %607 = vmatpush1.msra.mxu0 0.0
          %608 = vmatprep.subr.mxu0 0.0
          %609 = vmatpush1.msra.mxu0 0.0
          %610 = vmatprep.subr.mxu0 0.0
          %611 = vmatpush1.msra.mxu0 0.0
          %612 = vmatprep.subr.mxu0 0.0
          %613 = vmatpush1.msra.mxu0 0.0
          %614 = vmatprep.subr.mxu0 0.0
          %615 = vmatpush1.msra.mxu0 0.0
          %616 = vmatprep.subr.mxu0 0.0
          %617 = vmatpush1.msra.mxu0 0.0
          %618 = vmatprep.subr.mxu0 0.0
          %619 = vmatpush1.msra.mxu0 0.0
          %620 = vmatprep.subr.mxu0 0.0
          %621 = vmatpush1.msra.mxu0 0.0
          %622 = vmatprep.subr.mxu0 0.0
          %623 = vmatpush1.msra.mxu0 0.0
          %624 = vmatprep.subr.mxu0 0.0
          %625 = vmatpush1.msra.mxu0 0.0
          %626 = vmatprep.subr.mxu0 0.0
          %627 = vmatpush1.msra.mxu0 0.0
          %628 = vmatprep.subr.mxu0 0.0
          %629 = vmatpush1.msra.mxu0 0.0
          %630 = vmatprep.subr.mxu0 0.0
          %631 = vmatpush1.msra.mxu0 0.0
          %632 = vmatprep.mubr.f32.mxu0 0.0
          %v633 = vand.u32 %v388, 4294901760
          %v634 = vsub.f32 %v388, %v633
          %635 = vmatmul.mubr.f32.gmra.mrb[0].mxu0 %v634
          %v636 = vpop.f32.mrb[0].mxu0
          %v637 = vadd.f32 %v557, %v636
          %v638 = vpop.f32.mrb[0].mxu0
          %639 = vdwg.mxu0
          %640 = vmatprep.subr.mxu0 0.0
          %v641 = vand.u32 %v382, 4294901760
          %642 = vmatpush1.msra.mxu0 %v641
          %643 = vmatprep.subr.mxu0 0.0
          %v644 = vand.u32 %v383, 4294901760
          %645 = vmatpush1.msra.mxu0 %v644
          %646 = vmatprep.subr.mxu0 0.0
          %v647 = vand.u32 %v384, 4294901760
          %648 = vmatpush1.msra.mxu0 %v647
          %649 = vmatprep.subr.mxu0 0.0
          %v650 = vand.u32 %v385, 4294901760
          %651 = vmatpush1.msra.mxu0 %v650
          %652 = vmatprep.subr.mxu0 0.0
          %653 = vmatpush1.msra.mxu0 0.0
          %654 = vmatprep.subr.mxu0 0.0
          %655 = vmatpush1.msra.mxu0 0.0
          %656 = vmatprep.subr.mxu0 0.0
          %657 = vmatpush1.msra.mxu0 0.0
          %658 = vmatprep.subr.mxu0 0.0
          %659 = vmatpush1.msra.mxu0 0.0
          %660 = vmatprep.subr.mxu0 0.0
          %661 = vmatpush1.msra.mxu0 0.0
          %662 = vmatprep.subr.mxu0 0.0
          %663 = vmatpush1.msra.mxu0 0.0
          %664 = vmatprep.subr.mxu0 0.0
          %665 = vmatpush1.msra.mxu0 0.0
          %666 = vmatprep.subr.mxu0 0.0
          %667 = vmatpush1.msra.mxu0 0.0
          %668 = vmatprep.subr.mxu0 0.0
          %669 = vmatpush1.msra.mxu0 0.0
          %670 = vmatprep.subr.mxu0 0.0
          %671 = vmatpush1.msra.mxu0 0.0
          %672 = vmatprep.subr.mxu0 0.0
          %673 = vmatpush1.msra.mxu0 0.0
          %674 = vmatprep.subr.mxu0 0.0
          %675 = vmatpush1.msra.mxu0 0.0
          %676 = vmatprep.subr.mxu0 0.0
          %677 = vmatpush1.msra.mxu0 0.0
          %678 = vmatprep.subr.mxu0 0.0
          %679 = vmatpush1.msra.mxu0 0.0
          %680 = vmatprep.subr.mxu0 0.0
          %681 = vmatpush1.msra.mxu0 0.0
          %682 = vmatprep.subr.mxu0 0.0
          %683 = vmatpush1.msra.mxu0 0.0
          %684 = vmatprep.subr.mxu0 0.0
          %685 = vmatpush1.msra.mxu0 0.0
          %686 = vmatprep.subr.mxu0 0.0
          %687 = vmatpush1.msra.mxu0 0.0
          %688 = vmatprep.subr.mxu0 0.0
          %689 = vmatpush1.msra.mxu0 0.0
          %690 = vmatprep.subr.mxu0 0.0
          %691 = vmatpush1.msra.mxu0 0.0
          %692 = vmatprep.subr.mxu0 0.0
          %693 = vmatpush1.msra.mxu0 0.0
          %694 = vmatprep.subr.mxu0 0.0
          %695 = vmatpush1.msra.mxu0 0.0
          %696 = vmatprep.subr.mxu0 0.0
          %697 = vmatpush1.msra.mxu0 0.0
          %698 = vmatprep.subr.mxu0 0.0
          %699 = vmatpush1.msra.mxu0 0.0
          %700 = vmatprep.subr.mxu0 0.0
          %701 = vmatpush1.msra.mxu0 0.0
          %702 = vmatprep.subr.mxu0 0.0
          %703 = vmatpush1.msra.mxu0 0.0
          %704 = vmatprep.subr.mxu0 0.0
          %705 = vmatpush1.msra.mxu0 0.0
          %706 = vmatprep.subr.mxu0 0.0
          %707 = vmatpush1.msra.mxu0 0.0
          %708 = vmatprep.mubr.f32.mxu0 0.0
          %v709 = vand.u32 %v388, 4294901760
          %v710 = vsub.f32 %v388, %v709
          %v711 = vand.u32 %v710, 4294901760
          %712 = vmatmul.mubr.f32.gmra.mrb[0].mxu0 %v711
          %v713 = vpop.f32.mrb[0].mxu0
          %v714 = vadd.f32 %v637, %v713
          %v715 = vpop.f32.mrb[0].mxu0
          %716 = vdwg.mxu0
          %717 = vmatprep.subr.mxu0 0.0
          %v718 = vand.u32 %v382, 4294901760
          %v719 = vsub.f32 %v382, %v718
          %v720 = vand.u32 %v719, 4294901760
          %721 = vmatpush1.msra.mxu0 %v720
          %722 = vmatprep.subr.mxu0 0.0
          %v723 = vand.u32 %v383, 4294901760
          %v724 = vsub.f32 %v383, %v723
          %v725 = vand.u32 %v724, 4294901760
          %726 = vmatpush1.msra.mxu0 %v725
          %727 = vmatprep.subr.mxu0 0.0
          %v728 = vand.u32 %v384, 4294901760
          %v729 = vsub.f32 %v384, %v728
          %v730 = vand.u32 %v729, 4294901760
          %731 = vmatpush1.msra.mxu0 %v730
          %732 = vmatprep.subr.mxu0 0.0
          %v733 = vand.u32 %v385, 4294901760
          %v734 = vsub.f32 %v385, %v733
          %v735 = vand.u32 %v734, 4294901760
          %736 = vmatpush1.msra.mxu0 %v735
          %737 = vmatprep.subr.mxu0 0.0
          %738 = vmatpush1.msra.mxu0 0.0
          %739 = vmatprep.subr.mxu0 0.0
          %740 = vmatpush1.msra.mxu0 0.0
          %741 = vmatprep.subr.mxu0 0.0
          %742 = vmatpush1.msra.mxu0 0.0
          %743 = vmatprep.subr.mxu0 0.0
          %744 = vmatpush1.msra.mxu0 0.0
          %745 = vmatprep.subr.mxu0 0.0
          %746 = vmatpush1.msra.mxu0 0.0
          %747 = vmatprep.subr.mxu0 0.0
          %748 = vmatpush1.msra.mxu0 0.0
          %749 = vmatprep.subr.mxu0 0.0
          %750 = vmatpush1.msra.mxu0 0.0
          %751 = vmatprep.subr.mxu0 0.0
          %752 = vmatpush1.msra.mxu0 0.0
          %753 = vmatprep.subr.mxu0 0.0
          %754 = vmatpush1.msra.mxu0 0.0
          %755 = vmatprep.subr.mxu0 0.0
          %756 = vmatpush1.msra.mxu0 0.0
          %757 = vmatprep.subr.mxu0 0.0
          %758 = vmatpush1.msra.mxu0 0.0
          %759 = vmatprep.subr.mxu0 0.0
          %760 = vmatpush1.msra.mxu0 0.0
          %761 = vmatprep.subr.mxu0 0.0
          %762 = vmatpush1.msra.mxu0 0.0
          %763 = vmatprep.subr.mxu0 0.0
          %764 = vmatpush1.msra.mxu0 0.0
          %765 = vmatprep.subr.mxu0 0.0
          %766 = vmatpush1.msra.mxu0 0.0
          %767 = vmatprep.subr.mxu0 0.0
          %768 = vmatpush1.msra.mxu0 0.0
          %769 = vmatprep.subr.mxu0 0.0
          %770 = vmatpush1.msra.mxu0 0.0
          %771 = vmatprep.subr.mxu0 0.0
          %772 = vmatpush1.msra.mxu0 0.0
          %773 = vmatprep.subr.mxu0 0.0
          %774 = vmatpush1.msra.mxu0 0.0
          %775 = vmatprep.subr.mxu0 0.0
          %776 = vmatpush1.msra.mxu0 0.0
          %777 = vmatprep.subr.mxu0 0.0
          %778 = vmatpush1.msra.mxu0 0.0
          %779 = vmatprep.subr.mxu0 0.0
          %780 = vmatpush1.msra.mxu0 0.0
          %781 = vmatprep.subr.mxu0 0.0
          %782 = vmatpush1.msra.mxu0 0.0
          %783 = vmatprep.subr.mxu0 0.0
          %784 = vmatpush1.msra.mxu0 0.0
          %785 = vmatprep.subr.mxu0 0.0
          %786 = vmatpush1.msra.mxu0 0.0
          %787 = vmatprep.subr.mxu0 0.0
          %788 = vmatpush1.msra.mxu0 0.0
          %789 = vmatprep.subr.mxu0 0.0
          %790 = vmatpush1.msra.mxu0 0.0
          %791 = vmatprep.subr.mxu0 0.0
          %792 = vmatpush1.msra.mxu0 0.0
          %793 = vmatprep.mubr.f32.mxu0 0.0
          %v794 = vand.u32 %v388, 4294901760
          %795 = vmatmul.mubr.f32.gmra.mrb[0].mxu0 %v794
          %v796 = vpop.f32.mrb[0].mxu0
          %v797 = vadd.f32 %v714, %v796
          %v798 = vpop.f32.mrb[0].mxu0
          %799 = vdwg.mxu0
          %800 = vmatprep.subr.mxu0 0.0
          %v801 = vand.u32 %v382, 4294901760
          %802 = vmatpush1.msra.mxu0 %v801
          %803 = vmatprep.subr.mxu0 0.0
          %v804 = vand.u32 %v383, 4294901760
          %805 = vmatpush1.msra.mxu0 %v804
          %806 = vmatprep.subr.mxu0 0.0
          %v807 = vand.u32 %v384, 4294901760
          %808 = vmatpush1.msra.mxu0 %v807
          %809 = vmatprep.subr.mxu0 0.0
          %v810 = vand.u32 %v385, 4294901760
          %811 = vmatpush1.msra.mxu0 %v810
          %812 = vmatprep.subr.mxu0 0.0
          %813 = vmatpush1.msra.mxu0 0.0
          %814 = vmatprep.subr.mxu0 0.0
          %815 = vmatpush1.msra.mxu0 0.0
          %816 = vmatprep.subr.mxu0 0.0
          %817 = vmatpush1.msra.mxu0 0.0
          %818 = vmatprep.subr.mxu0 0.0
          %819 = vmatpush1.msra.mxu0 0.0
          %820 = vmatprep.subr.mxu0 0.0
          %821 = vmatpush1.msra.mxu0 0.0
          %822 = vmatprep.subr.mxu0 0.0
          %823 = vmatpush1.msra.mxu0 0.0
          %824 = vmatprep.subr.mxu0 0.0
          %825 = vmatpush1.msra.mxu0 0.0
          %826 = vmatprep.subr.mxu0 0.0
          %827 = vmatpush1.msra.mxu0 0.0
          %828 = vmatprep.subr.mxu0 0.0
          %829 = vmatpush1.msra.mxu0 0.0
          %830 = vmatprep.subr.mxu0 0.0
          %831 = vmatpush1.msra.mxu0 0.0
          %832 = vmatprep.subr.mxu0 0.0
          %833 = vmatpush1.msra.mxu0 0.0
          %834 = vmatprep.subr.mxu0 0.0
          %835 = vmatpush1.msra.mxu0 0.0
          %836 = vmatprep.subr.mxu0 0.0
          %837 = vmatpush1.msra.mxu0 0.0
          %838 = vmatprep.subr.mxu0 0.0
          %839 = vmatpush1.msra.mxu0 0.0
          %840 = vmatprep.subr.mxu0 0.0
          %841 = vmatpush1.msra.mxu0 0.0
          %842 = vmatprep.subr.mxu0 0.0
          %843 = vmatpush1.msra.mxu0 0.0
          %844 = vmatprep.subr.mxu0 0.0
          %845 = vmatpush1.msra.mxu0 0.0
          %846 = vmatprep.subr.mxu0 0.0
          %847 = vmatpush1.msra.mxu0 0.0
          %848 = vmatprep.subr.mxu0 0.0
          %849 = vmatpush1.msra.mxu0 0.0
          %850 = vmatprep.subr.mxu0 0.0
          %851 = vmatpush1.msra.mxu0 0.0
          %852 = vmatprep.subr.mxu0 0.0
          %853 = vmatpush1.msra.mxu0 0.0
          %854 = vmatprep.subr.mxu0 0.0
          %855 = vmatpush1.msra.mxu0 0.0
          %856 = vmatprep.subr.mxu0 0.0
          %857 = vmatpush1.msra.mxu0 0.0
          %858 = vmatprep.subr.mxu0 0.0
          %859 = vmatpush1.msra.mxu0 0.0
          %860 = vmatprep.subr.mxu0 0.0
          %861 = vmatpush1.msra.mxu0 0.0
          %862 = vmatprep.subr.mxu0 0.0
          %863 = vmatpush1.msra.mxu0 0.0
          %864 = vmatprep.subr.mxu0 0.0
          %865 = vmatpush1.msra.mxu0 0.0
          %866 = vmatprep.subr.mxu0 0.0
          %867 = vmatpush1.msra.mxu0 0.0
          %868 = vmatprep.mubr.f32.mxu0 0.0
          %v869 = vand.u32 %v388, 4294901760
          %870 = vmatmul.mubr.f32.gmra.mrb[0].mxu0 %v869
          %v871 = vpop.f32.mrb[0].mxu0
          %v872 = vadd.f32 %v797, %v871
          %v873 = vpop.f32.mrb[0].mxu0
          %874 = vdwg.mxu0
          %v876 = vsel %vm386, %v375, 0
          %878 = vmatprep.subr.mxu0 0.0
          %v879 = vand.u32 %v378, 4294901760
          %880 = vmatpush1.msra.mxu0 %v879
          %881 = vmatprep.subr.mxu0 0.0
          %v882 = vand.u32 %v379, 4294901760
          %883 = vmatpush1.msra.mxu0 %v882
          %884 = vmatprep.subr.mxu0 0.0
          %v885 = vand.u32 %v380, 4294901760
          %886 = vmatpush1.msra.mxu0 %v885
          %887 = vmatprep.subr.mxu0 0.0
          %v888 = vand.u32 %v381, 4294901760
          %889 = vmatpush1.msra.mxu0 %v888
          %890 = vmatprep.subr.mxu0 0.0
          %891 = vmatpush1.msra.mxu0 0.0
          %892 = vmatprep.subr.mxu0 0.0
          %893 = vmatpush1.msra.mxu0 0.0
          %894 = vmatprep.subr.mxu0 0.0
          %895 = vmatpush1.msra.mxu0 0.0
          %896 = vmatprep.subr.mxu0 0.0
          %897 = vmatpush1.msra.mxu0 0.0
          %898 = vmatprep.subr.mxu0 0.0
          %899 = vmatpush1.msra.mxu0 0.0
          %900 = vmatprep.subr.mxu0 0.0
          %901 = vmatpush1.msra.mxu0 0.0
          %902 = vmatprep.subr.mxu0 0.0
          %903 = vmatpush1.msra.mxu0 0.0
          %904 = vmatprep.subr.mxu0 0.0
          %905 = vmatpush1.msra.mxu0 0.0
          %906 = vmatprep.subr.mxu0 0.0
          %907 = vmatpush1.msra.mxu0 0.0
          %908 = vmatprep.subr.mxu0 0.0
          %909 = vmatpush1.msra.mxu0 0.0
          %910 = vmatprep.subr.mxu0 0.0
          %911 = vmatpush1.msra.mxu0 0.0
          %912 = vmatprep.subr.mxu0 0.0
          %913 = vmatpush1.msra.mxu0 0.0
          %914 = vmatprep.subr.mxu0 0.0
          %915 = vmatpush1.msra.mxu0 0.0
          %916 = vmatprep.subr.mxu0 0.0
          %917 = vmatpush1.msra.mxu0 0.0
          %918 = vmatprep.subr.mxu0 0.0
          %919 = vmatpush1.msra.mxu0 0.0
          %920 = vmatprep.subr.mxu0 0.0
          %921 = vmatpush1.msra.mxu0 0.0
          %922 = vmatprep.subr.mxu0 0.0
          %923 = vmatpush1.msra.mxu0 0.0
          %924 = vmatprep.subr.mxu0 0.0
          %925 = vmatpush1.msra.mxu0 0.0
          %926 = vmatprep.subr.mxu0 0.0
          %927 = vmatpush1.msra.mxu0 0.0
          %928 = vmatprep.subr.mxu0 0.0
          %929 = vmatpush1.msra.mxu0 0.0
          %930 = vmatprep.subr.mxu0 0.0
          %931 = vmatpush1.msra.mxu0 0.0
          %932 = vmatprep.subr.mxu0 0.0
          %933 = vmatpush1.msra.mxu0 0.0
          %934 = vmatprep.subr.mxu0 0.0
          %935 = vmatpush1.msra.mxu0 0.0
          %936 = vmatprep.subr.mxu0 0.0
          %937 = vmatpush1.msra.mxu0 0.0
          %938 = vmatprep.subr.mxu0 0.0
          %939 = vmatpush1.msra.mxu0 0.0
          %940 = vmatprep.subr.mxu0 0.0
          %941 = vmatpush1.msra.mxu0 0.0
          %942 = vmatprep.subr.mxu0 0.0
          %943 = vmatpush1.msra.mxu0 0.0
          %944 = vmatprep.subr.mxu0 0.0
          %945 = vmatpush1.msra.mxu0 0.0
          %946 = vmatprep.mubr.f32.mxu0 0.0
          %v947 = vand.u32 %v876, 4294901760
          %v948 = vsub.f32 %v876, %v947
          %v949 = vand.u32 %v948, 4294901760
          %v950 = vsub.f32 %v948, %v949
          %v951 = vand.u32 %v950, 4294901760
          %952 = vmatmul.mubr.f32.gmra.mrb[0].mxu0 %v951
          %v953 = vpop.f32.mrb[0].mxu0
          %v954 = vadd.f32 %v872, %v953
          %v955 = vpop.f32.mrb[0].mxu0
          %956 = vdwg.mxu0
          %957 = vmatprep.subr.mxu0 0.0
          %v958 = vand.u32 %v378, 4294901760
          %v959 = vsub.f32 %v378, %v958
          %v960 = vand.u32 %v959, 4294901760
          %v961 = vsub.f32 %v959, %v960
          %v962 = vand.u32 %v961, 4294901760
          %963 = vmatpush1.msra.mxu0 %v962
          %964 = vmatprep.subr.mxu0 0.0
          %v965 = vand.u32 %v379, 4294901760
          %v966 = vsub.f32 %v379, %v965
          %v967 = vand.u32 %v966, 4294901760
          %v968 = vsub.f32 %v966, %v967
          %v969 = vand.u32 %v968, 4294901760
          %970 = vmatpush1.msra.mxu0 %v969
          %971 = vmatprep.subr.mxu0 0.0
          %v972 = vand.u32 %v380, 4294901760
          %v973 = vsub.f32 %v380, %v972
          %v974 = vand.u32 %v973, 4294901760
          %v975 = vsub.f32 %v973, %v974
          %v976 = vand.u32 %v975, 4294901760
          %977 = vmatpush1.msra.mxu0 %v976
          %978 = vmatprep.subr.mxu0 0.0
          %v979 = vand.u32 %v381, 4294901760
          %v980 = vsub.f32 %v381, %v979
          %v981 = vand.u32 %v980, 4294901760
          %v982 = vsub.f32 %v980, %v981
          %v983 = vand.u32 %v982, 4294901760
          %984 = vmatpush1.msra.mxu0 %v983
          %985 = vmatprep.subr.mxu0 0.0
          %986 = vmatpush1.msra.mxu0 0.0
          %987 = vmatprep.subr.mxu0 0.0
          %988 = vmatpush1.msra.mxu0 0.0
          %989 = vmatprep.subr.mxu0 0.0
          %990 = vmatpush1.msra.mxu0 0.0
          %991 = vmatprep.subr.mxu0 0.0
          %992 = vmatpush1.msra.mxu0 0.0
          %993 = vmatprep.subr.mxu0 0.0
          %994 = vmatpush1.msra.mxu0 0.0
          %995 = vmatprep.subr.mxu0 0.0
          %996 = vmatpush1.msra.mxu0 0.0
          %997 = vmatprep.subr.mxu0 0.0
          %998 = vmatpush1.msra.mxu0 0.0
          %999 = vmatprep.subr.mxu0 0.0
          %1000 = vmatpush1.msra.mxu0 0.0
          %1001 = vmatprep.subr.mxu0 0.0
          %1002 = vmatpush1.msra.mxu0 0.0
          %1003 = vmatprep.subr.mxu0 0.0
          %1004 = vmatpush1.msra.mxu0 0.0
          %1005 = vmatprep.subr.mxu0 0.0
          %1006 = vmatpush1.msra.mxu0 0.0
          %1007 = vmatprep.subr.mxu0 0.0
          %1008 = vmatpush1.msra.mxu0 0.0
          %1009 = vmatprep.subr.mxu0 0.0
          %1010 = vmatpush1.msra.mxu0 0.0
          %1011 = vmatprep.subr.mxu0 0.0
          %1012 = vmatpush1.msra.mxu0 0.0
          %1013 = vmatprep.subr.mxu0 0.0
          %1014 = vmatpush1.msra.mxu0 0.0
          %1015 = vmatprep.subr.mxu0 0.0
          %1016 = vmatpush1.msra.mxu0 0.0
          %1017 = vmatprep.subr.mxu0 0.0
          %1018 = vmatpush1.msra.mxu0 0.0
          %1019 = vmatprep.subr.mxu0 0.0
          %1020 = vmatpush1.msra.mxu0 0.0
          %1021 = vmatprep.subr.mxu0 0.0
          %1022 = vmatpush1.msra.mxu0 0.0
          %1023 = vmatprep.subr.mxu0 0.0
          %1024 = vmatpush1.msra.mxu0 0.0
          %1025 = vmatprep.subr.mxu0 0.0
          %1026 = vmatpush1.msra.mxu0 0.0
          %1027 = vmatprep.subr.mxu0 0.0
          %1028 = vmatpush1.msra.mxu0 0.0
          %1029 = vmatprep.subr.mxu0 0.0
          %1030 = vmatpush1.msra.mxu0 0.0
          %1031 = vmatprep.subr.mxu0 0.0
          %1032 = vmatpush1.msra.mxu0 0.0
          %1033 = vmatprep.subr.mxu0 0.0
          %1034 = vmatpush1.msra.mxu0 0.0
          %1035 = vmatprep.subr.mxu0 0.0
          %1036 = vmatpush1.msra.mxu0 0.0
          %1037 = vmatprep.subr.mxu0 0.0
          %1038 = vmatpush1.msra.mxu0 0.0
          %1039 = vmatprep.subr.mxu0 0.0
          %1040 = vmatpush1.msra.mxu0 0.0
          %1041 = vmatprep.mubr.f32.mxu0 0.0
          %v1042 = vand.u32 %v876, 4294901760
          %1043 = vmatmul.mubr.f32.gmra.mrb[0].mxu0 %v1042
          %v1044 = vpop.f32.mrb[0].mxu0
          %v1045 = vadd.f32 %v954, %v1044
          %v1046 = vpop.f32.mrb[0].mxu0
          %1047 = vdwg.mxu0
          %1048 = vmatprep.subr.mxu0 0.0
          %v1049 = vand.u32 %v378, 4294901760
          %v1050 = vsub.f32 %v378, %v1049
          %1051 = vmatpush1.msra.mxu0 %v1050
          %1052 = vmatprep.subr.mxu0 0.0
          %v1053 = vand.u32 %v379, 4294901760
          %v1054 = vsub.f32 %v379, %v1053
          %1055 = vmatpush1.msra.mxu0 %v1054
          %1056 = vmatprep.subr.mxu0 0.0
          %v1057 = vand.u32 %v380, 4294901760
          %v1058 = vsub.f32 %v380, %v1057
          %1059 = vmatpush1.msra.mxu0 %v1058
          %1060 = vmatprep.subr.mxu0 0.0
          %v1061 = vand.u32 %v381, 4294901760
          %v1062 = vsub.f32 %v381, %v1061
          %1063 = vmatpush1.msra.mxu0 %v1062
          %1064 = vmatprep.subr.mxu0 0.0
          %1065 = vmatpush1.msra.mxu0 0.0
          %1066 = vmatprep.subr.mxu0 0.0
          %1067 = vmatpush1.msra.mxu0 0.0
          %1068 = vmatprep.subr.mxu0 0.0
          %1069 = vmatpush1.msra.mxu0 0.0
          %1070 = vmatprep.subr.mxu0 0.0
          %1071 = vmatpush1.msra.mxu0 0.0
          %1072 = vmatprep.subr.mxu0 0.0
          %1073 = vmatpush1.msra.mxu0 0.0
          %1074 = vmatprep.subr.mxu0 0.0
          %1075 = vmatpush1.msra.mxu0 0.0
          %1076 = vmatprep.subr.mxu0 0.0
          %1077 = vmatpush1.msra.mxu0 0.0
          %1078 = vmatprep.subr.mxu0 0.0
          %1079 = vmatpush1.msra.mxu0 0.0
          %1080 = vmatprep.subr.mxu0 0.0
          %1081 = vmatpush1.msra.mxu0 0.0
          %1082 = vmatprep.subr.mxu0 0.0
          %1083 = vmatpush1.msra.mxu0 0.0
          %1084 = vmatprep.subr.mxu0 0.0
          %1085 = vmatpush1.msra.mxu0 0.0
          %1086 = vmatprep.subr.mxu0 0.0
          %1087 = vmatpush1.msra.mxu0 0.0
          %1088 = vmatprep.subr.mxu0 0.0
          %1089 = vmatpush1.msra.mxu0 0.0
          %1090 = vmatprep.subr.mxu0 0.0
          %1091 = vmatpush1.msra.mxu0 0.0
          %1092 = vmatprep.subr.mxu0 0.0
          %1093 = vmatpush1.msra.mxu0 0.0
          %1094 = vmatprep.subr.mxu0 0.0
          %1095 = vmatpush1.msra.mxu0 0.0
          %1096 = vmatprep.subr.mxu0 0.0
          %1097 = vmatpush1.msra.mxu0 0.0
          %1098 = vmatprep.subr.mxu0 0.0
          %1099 = vmatpush1.msra.mxu0 0.0
          %1100 = vmatprep.subr.mxu0 0.0
          %1101 = vmatpush1.msra.mxu0 0.0
          %1102 = vmatprep.subr.mxu0 0.0
          %1103 = vmatpush1.msra.mxu0 0.0
          %1104 = vmatprep.subr.mxu0 0.0
          %1105 = vmatpush1.msra.mxu0 0.0
          %1106 = vmatprep.subr.mxu0 0.0
          %1107 = vmatpush1.msra.mxu0 0.0
          %1108 = vmatprep.subr.mxu0 0.0
          %1109 = vmatpush1.msra.mxu0 0.0
          %1110 = vmatprep.subr.mxu0 0.0
          %1111 = vmatpush1.msra.mxu0 0.0
          %1112 = vmatprep.subr.mxu0 0.0
          %1113 = vmatpush1.msra.mxu0 0.0
          %1114 = vmatprep.subr.mxu0 0.0
          %1115 = vmatpush1.msra.mxu0 0.0
          %1116 = vmatprep.subr.mxu0 0.0
          %1117 = vmatpush1.msra.mxu0 0.0
          %1118 = vmatprep.subr.mxu0 0.0
          %1119 = vmatpush1.msra.mxu0 0.0
          %1120 = vmatprep.mubr.f32.mxu0 0.0
          %v1121 = vand.u32 %v876, 4294901760
          %v1122 = vsub.f32 %v876, %v1121
          %1123 = vmatmul.mubr.f32.gmra.mrb[0].mxu0 %v1122
          %v1124 = vpop.f32.mrb[0].mxu0
          %v1125 = vadd.f32 %v1045, %v1124
          %v1126 = vpop.f32.mrb[0].mxu0
          %1127 = vdwg.mxu0
          %1128 = vmatprep.subr.mxu0 0.0
          %v1129 = vand.u32 %v378, 4294901760
          %1130 = vmatpush1.msra.mxu0 %v1129
          %1131 = vmatprep.subr.mxu0 0.0
          %v1132 = vand.u32 %v379, 4294901760
          %1133 = vmatpush1.msra.mxu0 %v1132
          %1134 = vmatprep.subr.mxu0 0.0
          %v1135 = vand.u32 %v380, 4294901760
          %1136 = vmatpush1.msra.mxu0 %v1135
          %1137 = vmatprep.subr.mxu0 0.0
          %v1138 = vand.u32 %v381, 4294901760
          %1139 = vmatpush1.msra.mxu0 %v1138
          %1140 = vmatprep.subr.mxu0 0.0
          %1141 = vmatpush1.msra.mxu0 0.0
          %1142 = vmatprep.subr.mxu0 0.0
          %1143 = vmatpush1.msra.mxu0 0.0
          %1144 = vmatprep.subr.mxu0 0.0
          %1145 = vmatpush1.msra.mxu0 0.0
          %1146 = vmatprep.subr.mxu0 0.0
          %1147 = vmatpush1.msra.mxu0 0.0
          %1148 = vmatprep.subr.mxu0 0.0
          %1149 = vmatpush1.msra.mxu0 0.0
          %1150 = vmatprep.subr.mxu0 0.0
          %1151 = vmatpush1.msra.mxu0 0.0
          %1152 = vmatprep.subr.mxu0 0.0
          %1153 = vmatpush1.msra.mxu0 0.0
          %1154 = vmatprep.subr.mxu0 0.0
          %1155 = vmatpush1.msra.mxu0 0.0
          %1156 = vmatprep.subr.mxu0 0.0
          %1157 = vmatpush1.msra.mxu0 0.0
          %1158 = vmatprep.subr.mxu0 0.0
          %1159 = vmatpush1.msra.mxu0 0.0
          %1160 = vmatprep.subr.mxu0 0.0
          %1161 = vmatpush1.msra.mxu0 0.0
          %1162 = vmatprep.subr.mxu0 0.0
          %1163 = vmatpush1.msra.mxu0 0.0
          %1164 = vmatprep.subr.mxu0 0.0
          %1165 = vmatpush1.msra.mxu0 0.0
          %1166 = vmatprep.subr.mxu0 0.0
          %1167 = vmatpush1.msra.mxu0 0.0
          %1168 = vmatprep.subr.mxu0 0.0
          %1169 = vmatpush1.msra.mxu0 0.0
          %1170 = vmatprep.subr.mxu0 0.0
          %1171 = vmatpush1.msra.mxu0 0.0
          %1172 = vmatprep.subr.mxu0 0.0
          %1173 = vmatpush1.msra.mxu0 0.0
          %1174 = vmatprep.subr.mxu0 0.0
          %1175 = vmatpush1.msra.mxu0 0.0
          %1176 = vmatprep.subr.mxu0 0.0
          %1177 = vmatpush1.msra.mxu0 0.0
          %1178 = vmatprep.subr.mxu0 0.0
          %1179 = vmatpush1.msra.mxu0 0.0
          %1180 = vmatprep.subr.mxu0 0.0
          %1181 = vmatpush1.msra.mxu0 0.0
          %1182 = vmatprep.subr.mxu0 0.0
          %1183 = vmatpush1.msra.mxu0 0.0
          %1184 = vmatprep.subr.mxu0 0.0
          %1185 = vmatpush1.msra.mxu0 0.0
          %1186 = vmatprep.subr.mxu0 0.0
          %1187 = vmatpush1.msra.mxu0 0.0
          %1188 = vmatprep.subr.mxu0 0.0
          %1189 = vmatpush1.msra.mxu0 0.0
          %1190 = vmatprep.subr.mxu0 0.0
          %1191 = vmatpush1.msra.mxu0 0.0
          %1192 = vmatprep.subr.mxu0 0.0
          %1193 = vmatpush1.msra.mxu0 0.0
          %1194 = vmatprep.subr.mxu0 0.0
          %1195 = vmatpush1.msra.mxu0 0.0
          %1196 = vmatprep.mubr.f32.mxu0 0.0
          %v1197 = vand.u32 %v876, 4294901760
          %v1198 = vsub.f32 %v876, %v1197
          %v1199 = vand.u32 %v1198, 4294901760
          %1200 = vmatmul.mubr.f32.gmra.mrb[0].mxu0 %v1199
          %v1201 = vpop.f32.mrb[0].mxu0
          %v1202 = vadd.f32 %v1125, %v1201
          %v1203 = vpop.f32.mrb[0].mxu0
          %1204 = vdwg.mxu0
          %1205 = vmatprep.subr.mxu0 0.0
          %v1206 = vand.u32 %v378, 4294901760
          %v1207 = vsub.f32 %v378, %v1206
          %v1208 = vand.u32 %v1207, 4294901760
          %1209 = vmatpush1.msra.mxu0 %v1208
          %1210 = vmatprep.subr.mxu0 0.0
          %v1211 = vand.u32 %v379, 4294901760
          %v1212 = vsub.f32 %v379, %v1211
          %v1213 = vand.u32 %v1212, 4294901760
          %1214 = vmatpush1.msra.mxu0 %v1213
          %1215 = vmatprep.subr.mxu0 0.0
          %v1216 = vand.u32 %v380, 4294901760
          %v1217 = vsub.f32 %v380, %v1216
          %v1218 = vand.u32 %v1217, 4294901760
          %1219 = vmatpush1.msra.mxu0 %v1218
          %1220 = vmatprep.subr.mxu0 0.0
          %v1221 = vand.u32 %v381, 4294901760
          %v1222 = vsub.f32 %v381, %v1221
          %v1223 = vand.u32 %v1222, 4294901760
          %1224 = vmatpush1.msra.mxu0 %v1223
          %1225 = vmatprep.subr.mxu0 0.0
          %1226 = vmatpush1.msra.mxu0 0.0
          %1227 = vmatprep.subr.mxu0 0.0
          %1228 = vmatpush1.msra.mxu0 0.0
          %1229 = vmatprep.subr.mxu0 0.0
          %1230 = vmatpush1.msra.mxu0 0.0
          %1231 = vmatprep.subr.mxu0 0.0
          %1232 = vmatpush1.msra.mxu0 0.0
          %1233 = vmatprep.subr.mxu0 0.0
          %1234 = vmatpush1.msra.mxu0 0.0
          %1235 = vmatprep.subr.mxu0 0.0
          %1236 = vmatpush1.msra.mxu0 0.0
          %1237 = vmatprep.subr.mxu0 0.0
          %1238 = vmatpush1.msra.mxu0 0.0
          %1239 = vmatprep.subr.mxu0 0.0
          %1240 = vmatpush1.msra.mxu0 0.0
          %1241 = vmatprep.subr.mxu0 0.0
          %1242 = vmatpush1.msra.mxu0 0.0
          %1243 = vmatprep.subr.mxu0 0.0
          %1244 = vmatpush1.msra.mxu0 0.0
          %1245 = vmatprep.subr.mxu0 0.0
          %1246 = vmatpush1.msra.mxu0 0.0
          %1247 = vmatprep.subr.mxu0 0.0
          %1248 = vmatpush1.msra.mxu0 0.0
          %1249 = vmatprep.subr.mxu0 0.0
          %1250 = vmatpush1.msra.mxu0 0.0
          %1251 = vmatprep.subr.mxu0 0.0
          %1252 = vmatpush1.msra.mxu0 0.0
          %1253 = vmatprep.subr.mxu0 0.0
          %1254 = vmatpush1.msra.mxu0 0.0
          %1255 = vmatprep.subr.mxu0 0.0
          %1256 = vmatpush1.msra.mxu0 0.0
          %1257 = vmatprep.subr.mxu0 0.0
          %1258 = vmatpush1.msra.mxu0 0.0
          %1259 = vmatprep.subr.mxu0 0.0
          %1260 = vmatpush1.msra.mxu0 0.0
          %1261 = vmatprep.subr.mxu0 0.0
          %1262 = vmatpush1.msra.mxu0 0.0
          %1263 = vmatprep.subr.mxu0 0.0
          %1264 = vmatpush1.msra.mxu0 0.0
          %1265 = vmatprep.subr.mxu0 0.0
          %1266 = vmatpush1.msra.mxu0 0.0
          %1267 = vmatprep.subr.mxu0 0.0
          %1268 = vmatpush1.msra.mxu0 0.0
          %1269 = vmatprep.subr.mxu0 0.0
          %1270 = vmatpush1.msra.mxu0 0.0
          %1271 = vmatprep.subr.mxu0 0.0
          %1272 = vmatpush1.msra.mxu0 0.0
          %1273 = vmatprep.subr.mxu0 0.0
          %1274 = vmatpush1.msra.mxu0 0.0
          %1275 = vmatprep.subr.mxu0 0.0
          %1276 = vmatpush1.msra.mxu0 0.0
          %1277 = vmatprep.subr.mxu0 0.0
          %1278 = vmatpush1.msra.mxu0 0.0
          %1279 = vmatprep.subr.mxu0 0.0
          %1280 = vmatpush1.msra.mxu0 0.0
          %1281 = vmatprep.mubr.f32.mxu0 0.0
          %v1282 = vand.u32 %v876, 4294901760
          %1283 = vmatmul.mubr.f32.gmra.mrb[0].mxu0 %v1282
          %v1284 = vpop.f32.mrb[0].mxu0
          %v1285 = vadd.f32 %v1202, %v1284
          %v1286 = vpop.f32.mrb[0].mxu0
          %1287 = vdwg.mxu0
          %1288 = vmatprep.subr.mxu0 0.0
          %v1289 = vand.u32 %v378, 4294901760
          %1290 = vmatpush1.msra.mxu0 %v1289
          %1291 = vmatprep.subr.mxu0 0.0
          %v1292 = vand.u32 %v379, 4294901760
          %1293 = vmatpush1.msra.mxu0 %v1292
          %1294 = vmatprep.subr.mxu0 0.0
          %v1295 = vand.u32 %v380, 4294901760
          %1296 = vmatpush1.msra.mxu0 %v1295
          %1297 = vmatprep.subr.mxu0 0.0
          %v1298 = vand.u32 %v381, 4294901760
          %1299 = vmatpush1.msra.mxu0 %v1298
          %1300 = vmatprep.subr.mxu0 0.0
          %1301 = vmatpush1.msra.mxu0 0.0
          %1302 = vmatprep.subr.mxu0 0.0
          %1303 = vmatpush1.msra.mxu0 0.0
          %1304 = vmatprep.subr.mxu0 0.0
          %1305 = vmatpush1.msra.mxu0 0.0
          %1306 = vmatprep.subr.mxu0 0.0
          %1307 = vmatpush1.msra.mxu0 0.0
          %1308 = vmatprep.subr.mxu0 0.0
          %1309 = vmatpush1.msra.mxu0 0.0
          %1310 = vmatprep.subr.mxu0 0.0
          %1311 = vmatpush1.msra.mxu0 0.0
          %1312 = vmatprep.subr.mxu0 0.0
          %1313 = vmatpush1.msra.mxu0 0.0
          %1314 = vmatprep.subr.mxu0 0.0
          %1315 = vmatpush1.msra.mxu0 0.0
          %1316 = vmatprep.subr.mxu0 0.0
          %1317 = vmatpush1.msra.mxu0 0.0
          %1318 = vmatprep.subr.mxu0 0.0
          %1319 = vmatpush1.msra.mxu0 0.0
          %1320 = vmatprep.subr.mxu0 0.0
          %1321 = vmatpush1.msra.mxu0 0.0
          %1322 = vmatprep.subr.mxu0 0.0
          %1323 = vmatpush1.msra.mxu0 0.0
          %1324 = vmatprep.subr.mxu0 0.0
          %1325 = vmatpush1.msra.mxu0 0.0
          %1326 = vmatprep.subr.mxu0 0.0
          %1327 = vmatpush1.msra.mxu0 0.0
          %1328 = vmatprep.subr.mxu0 0.0
          %1329 = vmatpush1.msra.mxu0 0.0
          %1330 = vmatprep.subr.mxu0 0.0
          %1331 = vmatpush1.msra.mxu0 0.0
          %1332 = vmatprep.subr.mxu0 0.0
          %1333 = vmatpush1.msra.mxu0 0.0
          %1334 = vmatprep.subr.mxu0 0.0
          %1335 = vmatpush1.msra.mxu0 0.0
          %1336 = vmatprep.subr.mxu0 0.0
          %1337 = vmatpush1.msra.mxu0 0.0
          %1338 = vmatprep.subr.mxu0 0.0
          %1339 = vmatpush1.msra.mxu0 0.0
          %1340 = vmatprep.subr.mxu0 0.0
          %1341 = vmatpush1.msra.mxu0 0.0
          %1342 = vmatprep.subr.mxu0 0.0
          %1343 = vmatpush1.msra.mxu0 0.0
          %1344 = vmatprep.subr.mxu0 0.0
          %1345 = vmatpush1.msra.mxu0 0.0
          %1346 = vmatprep.subr.mxu0 0.0
          %1347 = vmatpush1.msra.mxu0 0.0
          %1348 = vmatprep.subr.mxu0 0.0
          %1349 = vmatpush1.msra.mxu0 0.0
          %1350 = vmatprep.subr.mxu0 0.0
          %1351 = vmatpush1.msra.mxu0 0.0
          %1352 = vmatprep.subr.mxu0 0.0
          %1353 = vmatpush1.msra.mxu0 0.0
          %1354 = vmatprep.subr.mxu0 0.0
          %1355 = vmatpush1.msra.mxu0 0.0
          %1356 = vmatprep.mubr.f32.mxu0 0.0
          %v1357 = vand.u32 %v876, 4294901760
          %1358 = vmatmul.mubr.f32.gmra.mrb[0].mxu0 %v1357
          %v1359 = vpop.f32.mrb[0].mxu0
          %v1360 = vadd.f32 %v1285, %v1359
          %v1361 = vpop.f32.mrb[0].mxu0
          %1362 = vdwg.mxu0
          %v1363 = vld [vmem:[%s3] sm:$0x1]
          %v1365 = vlaneseq
          %v1366 = vshrl.u32 %v1365, 7
          %v1367 = vsub.s32 0, %v1366
          %v1368 = vrot.slane %v1363, %v1367
          %v1370 = vadd.f32 %v1360, %v1368
          %v1371 = vxor.u32 %v1370, 2147483648
          %v1372 = vmul.f32 %v1371, 1.442695
          %v1373 = vpow.pop %v1372
          %v1374 = vadd.f32 %v1373, 1.0
          %v1375 = vrcp.pop %v1374
          %v1376 = vmul.f32 1.0, %v1375
          %v1377 = vtanh.pop %v1370
          %1379 = vrot.lane.b32.xlu0 %v377, 32
          %v1380 = vpop.permute.xlu0 %1379
          %v1382 = vmul.f32 %v1376, %v1380
          %1384 = vrot.lane.b32.xlu0 %v1377, 64
          %v1385 = vpop.permute.xlu0 %1384
          %v1387 = vmul.f32 %v1376, %v1385
          %1389 = vrot.lane.b32.xlu0 %v1387, 32
          %v1390 = vpop.permute.xlu0 %1389
          %v1392 = vadd.f32 %v1382, %v1390
          %v1393 = vtanh.pop %v1392
          %1395 = vrot.lane.b32.xlu0 %v1393, 64
          %v1396 = vpop.permute.xlu0 %1395
          %v1398 = vmul.f32 %v1376, %v1396
          %1400 = vrot.lane.b32.xlu0 %v1398, 32
          %v1401 = vpop.permute.xlu0 %1400
          %vm1403 = vcmask 254976
          %1404 = vst.msk [vmem:[#allocation2] sm:$0x3] %vm1403, %v1401
          %1406 = vrot.lane.b32.xlu0 %v1392, 96
          %v1407 = vpop.permute.xlu0 %1406
          %1409 = vst.msk [vmem:[#allocation3] sm:$0x3] %vm1403, %v1407
        $region68: #{tpu_custom_call.1} parent=43 // pred_fallthru
          _
        %v1410 = vld [vmem:[#allocation2] sm:$0x3]
        %v1411 = vld [vmem:[%s323] sm:$0xff]
        %v1412 = vld [vmem:[%s323 + $0x8] sm:$0xff]
        %v1413 = vld [vmem:[%s323 + $0x10] sm:$0xff]
        %v1414 = vld [vmem:[%s323 + $0x18] sm:$0xff]
        %v1415 = vld [vmem:[%s362] sm:$0x1]
        %v1417 = vlaneseq
        %v1418 = vshrl.u32 %v1417, 7
        %v1419 = vsub.s32 0, %v1418
        %v1420 = vrot.slane %v1415, %v1419
        %vm1422 = vcmask 261120
        %v1424 = vsel %vm1422, %v1410, 0
        %1426 = vmatprep.subr.mxu0 0.0
        %v1427 = vand.u32 %v1411, 4294901760
        %1428 = vmatpush1.msra.mxu0 %v1427
        %1429 = vmatprep.subr.mxu0 0.0
        %v1430 = vand.u32 %v1412, 4294901760
        %1431 = vmatpush1.msra.mxu0 %v1430
        %1432 = vmatprep.subr.mxu0 0.0
        %v1433 = vand.u32 %v1413, 4294901760
        %1434 = vmatpush1.msra.mxu0 %v1433
        %1435 = vmatprep.subr.mxu0 0.0
        %v1436 = vand.u32 %v1414, 4294901760
        %1437 = vmatpush1.msra.mxu0 %v1436
        %1438 = vmatprep.subr.mxu0 0.0
        %1439 = vmatpush1.msra.mxu0 0.0
        %1440 = vmatprep.subr.mxu0 0.0
        %1441 = vmatpush1.msra.mxu0 0.0
        %1442 = vmatprep.subr.mxu0 0.0
        %1443 = vmatpush1.msra.mxu0 0.0
        %1444 = vmatprep.subr.mxu0 0.0
        %1445 = vmatpush1.msra.mxu0 0.0
        %1446 = vmatprep.subr.mxu0 0.0
        %1447 = vmatpush1.msra.mxu0 0.0
        %1448 = vmatprep.subr.mxu0 0.0
        %1449 = vmatpush1.msra.mxu0 0.0
        %1450 = vmatprep.subr.mxu0 0.0
        %1451 = vmatpush1.msra.mxu0 0.0
        %1452 = vmatprep.subr.mxu0 0.0
        %1453 = vmatpush1.msra.mxu0 0.0
        %1454 = vmatprep.subr.mxu0 0.0
        %1455 = vmatpush1.msra.mxu0 0.0
        %1456 = vmatprep.subr.mxu0 0.0
        %1457 = vmatpush1.msra.mxu0 0.0
        %1458 = vmatprep.subr.mxu0 0.0
        %1459 = vmatpush1.msra.mxu0 0.0
        %1460 = vmatprep.subr.mxu0 0.0
        %1461 = vmatpush1.msra.mxu0 0.0
        %1462 = vmatprep.subr.mxu0 0.0
        %1463 = vmatpush1.msra.mxu0 0.0
        %1464 = vmatprep.subr.mxu0 0.0
        %1465 = vmatpush1.msra.mxu0 0.0
        %1466 = vmatprep.subr.mxu0 0.0
        %1467 = vmatpush1.msra.mxu0 0.0
        %1468 = vmatprep.subr.mxu0 0.0
        %1469 = vmatpush1.msra.mxu0 0.0
        %1470 = vmatprep.subr.mxu0 0.0
        %1471 = vmatpush1.msra.mxu0 0.0
        %1472 = vmatprep.subr.mxu0 0.0
        %1473 = vmatpush1.msra.mxu0 0.0
        %1474 = vmatprep.subr.mxu0 0.0
        %1475 = vmatpush1.msra.mxu0 0.0
        %1476 = vmatprep.subr.mxu0 0.0
        %1477 = vmatpush1.msra.mxu0 0.0
        %1478 = vmatprep.subr.mxu0 0.0
        %1479 = vmatpush1.msra.mxu0 0.0
        %1480 = vmatprep.subr.mxu0 0.0
        %1481 = vmatpush1.msra.mxu0 0.0
        %1482 = vmatprep.subr.mxu0 0.0
        %1483 = vmatpush1.msra.mxu0 0.0
        %1484 = vmatprep.subr.mxu0 0.0
        %1485 = vmatpush1.msra.mxu0 0.0
        %1486 = vmatprep.subr.mxu0 0.0
        %1487 = vmatpush1.msra.mxu0 0.0
        %1488 = vmatprep.subr.mxu0 0.0
        %1489 = vmatpush1.msra.mxu0 0.0
        %1490 = vmatprep.subr.mxu0 0.0
        %1491 = vmatpush1.msra.mxu0 0.0
        %1492 = vmatprep.subr.mxu0 0.0
        %1493 = vmatpush1.msra.mxu0 0.0
        %1494 = vmatprep.mubr.f32.mxu0 0.0
        %v1495 = vand.u32 %v1424, 4294901760
        %v1496 = vsub.f32 %v1424, %v1495
        %v1497 = vand.u32 %v1496, 4294901760
        %v1498 = vsub.f32 %v1496, %v1497
        %v1499 = vand.u32 %v1498, 4294901760
        %1500 = vmatmul.mubr.f32.gmra.mrb[0].mxu0 %v1499
        %v1501 = vpop.f32.mrb[0].mxu0
        %v1502 = vadd.f32 %v1420, %v1501
        %v1503 = vpop.f32.mrb[0].mxu0
        %1504 = vdwg.mxu0
        %1505 = vmatprep.subr.mxu0 0.0
        %v1506 = vand.u32 %v1411, 4294901760
        %v1507 = vsub.f32 %v1411, %v1506
        %v1508 = vand.u32 %v1507, 4294901760
        %v1509 = vsub.f32 %v1507, %v1508
        %v1510 = vand.u32 %v1509, 4294901760
        %1511 = vmatpush1.msra.mxu0 %v1510
        %1512 = vmatprep.subr.mxu0 0.0
        %v1513 = vand.u32 %v1412, 4294901760
        %v1514 = vsub.f32 %v1412, %v1513
        %v1515 = vand.u32 %v1514, 4294901760
        %v1516 = vsub.f32 %v1514, %v1515
        %v1517 = vand.u32 %v1516, 4294901760
        %1518 = vmatpush1.msra.mxu0 %v1517
        %1519 = vmatprep.subr.mxu0 0.0
        %v1520 = vand.u32 %v1413, 4294901760
        %v1521 = vsub.f32 %v1413, %v1520
        %v1522 = vand.u32 %v1521, 4294901760
        %v1523 = vsub.f32 %v1521, %v1522
        %v1524 = vand.u32 %v1523, 4294901760
        %1525 = vmatpush1.msra.mxu0 %v1524
        %1526 = vmatprep.subr.mxu0 0.0
        %v1527 = vand.u32 %v1414, 4294901760
        %v1528 = vsub.f32 %v1414, %v1527
        %v1529 = vand.u32 %v1528, 4294901760
        %v1530 = vsub.f32 %v1528, %v1529
        %v1531 = vand.u32 %v1530, 4294901760
        %1532 = vmatpush1.msra.mxu0 %v1531
        %1533 = vmatprep.subr.mxu0 0.0
        %1534 = vmatpush1.msra.mxu0 0.0
        %1535 = vmatprep.subr.mxu0 0.0
        %1536 = vmatpush1.msra.mxu0 0.0
        %1537 = vmatprep.subr.mxu0 0.0
        %1538 = vmatpush1.msra.mxu0 0.0
        %1539 = vmatprep.subr.mxu0 0.0
        %1540 = vmatpush1.msra.mxu0 0.0
        %1541 = vmatprep.subr.mxu0 0.0
        %1542 = vmatpush1.msra.mxu0 0.0
        %1543 = vmatprep.subr.mxu0 0.0
        %1544 = vmatpush1.msra.mxu0 0.0
        %1545 = vmatprep.subr.mxu0 0.0
        %1546 = vmatpush1.msra.mxu0 0.0
        %1547 = vmatprep.subr.mxu0 0.0
        %1548 = vmatpush1.msra.mxu0 0.0
        %1549 = vmatprep.subr.mxu0 0.0
        %1550 = vmatpush1.msra.mxu0 0.0
        %1551 = vmatprep.subr.mxu0 0.0
        %1552 = vmatpush1.msra.mxu0 0.0
        %1553 = vmatprep.subr.mxu0 0.0
        %1554 = vmatpush1.msra.mxu0 0.0
        %1555 = vmatprep.subr.mxu0 0.0
        %1556 = vmatpush1.msra.mxu0 0.0
        %1557 = vmatprep.subr.mxu0 0.0
        %1558 = vmatpush1.msra.mxu0 0.0
        %1559 = vmatprep.subr.mxu0 0.0
        %1560 = vmatpush1.msra.mxu0 0.0
        %1561 = vmatprep.subr.mxu0 0.0
        %1562 = vmatpush1.msra.mxu0 0.0
        %1563 = vmatprep.subr.mxu0 0.0
        %1564 = vmatpush1.msra.mxu0 0.0
        %1565 = vmatprep.subr.mxu0 0.0
        %1566 = vmatpush1.msra.mxu0 0.0
        %1567 = vmatprep.subr.mxu0 0.0
        %1568 = vmatpush1.msra.mxu0 0.0
        %1569 = vmatprep.subr.mxu0 0.0
        %1570 = vmatpush1.msra.mxu0 0.0
        %1571 = vmatprep.subr.mxu0 0.0
        %1572 = vmatpush1.msra.mxu0 0.0
        %1573 = vmatprep.subr.mxu0 0.0
        %1574 = vmatpush1.msra.mxu0 0.0
        %1575 = vmatprep.subr.mxu0 0.0
        %1576 = vmatpush1.msra.mxu0 0.0
        %1577 = vmatprep.subr.mxu0 0.0
        %1578 = vmatpush1.msra.mxu0 0.0
        %1579 = vmatprep.subr.mxu0 0.0
        %1580 = vmatpush1.msra.mxu0 0.0
        %1581 = vmatprep.subr.mxu0 0.0
        %1582 = vmatpush1.msra.mxu0 0.0
        %1583 = vmatprep.subr.mxu0 0.0
        %1584 = vmatpush1.msra.mxu0 0.0
        %1585 = vmatprep.subr.mxu0 0.0
        %1586 = vmatpush1.msra.mxu0 0.0
        %1587 = vmatprep.subr.mxu0 0.0
        %1588 = vmatpush1.msra.mxu0 0.0
        %1589 = vmatprep.mubr.f32.mxu0 0.0
        %v1590 = vand.u32 %v1424, 4294901760
        %1591 = vmatmul.mubr.f32.gmra.mrb[0].mxu0 %v1590
        %v1592 = vpop.f32.mrb[0].mxu0
        %v1593 = vadd.f32 %v1502, %v1592
        %v1594 = vpop.f32.mrb[0].mxu0
        %1595 = vdwg.mxu0
        %1596 = vmatprep.subr.mxu0 0.0
        %v1597 = vand.u32 %v1411, 4294901760
        %v1598 = vsub.f32 %v1411, %v1597
        %1599 = vmatpush1.msra.mxu0 %v1598
        %1600 = vmatprep.subr.mxu0 0.0
        %v1601 = vand.u32 %v1412, 4294901760
        %v1602 = vsub.f32 %v1412, %v1601
        %1603 = vmatpush1.msra.mxu0 %v1602
        %1604 = vmatprep.subr.mxu0 0.0
        %v1605 = vand.u32 %v1413, 4294901760
        %v1606 = vsub.f32 %v1413, %v1605
        %1607 = vmatpush1.msra.mxu0 %v1606
        %1608 = vmatprep.subr.mxu0 0.0
        %v1609 = vand.u32 %v1414, 4294901760
        %v1610 = vsub.f32 %v1414, %v1609
        %1611 = vmatpush1.msra.mxu0 %v1610
        %1612 = vmatprep.subr.mxu0 0.0
        %1613 = vmatpush1.msra.mxu0 0.0
        %1614 = vmatprep.subr.mxu0 0.0
        %1615 = vmatpush1.msra.mxu0 0.0
        %1616 = vmatprep.subr.mxu0 0.0
        %1617 = vmatpush1.msra.mxu0 0.0
        %1618 = vmatprep.subr.mxu0 0.0
        %1619 = vmatpush1.msra.mxu0 0.0
        %1620 = vmatprep.subr.mxu0 0.0
        %1621 = vmatpush1.msra.mxu0 0.0
        %1622 = vmatprep.subr.mxu0 0.0
        %1623 = vmatpush1.msra.mxu0 0.0
        %1624 = vmatprep.subr.mxu0 0.0
        %1625 = vmatpush1.msra.mxu0 0.0
        %1626 = vmatprep.subr.mxu0 0.0
        %1627 = vmatpush1.msra.mxu0 0.0
        %1628 = vmatprep.subr.mxu0 0.0
        %1629 = vmatpush1.msra.mxu0 0.0
        %1630 = vmatprep.subr.mxu0 0.0
        %1631 = vmatpush1.msra.mxu0 0.0
        %1632 = vmatprep.subr.mxu0 0.0
        %1633 = vmatpush1.msra.mxu0 0.0
        %1634 = vmatprep.subr.mxu0 0.0
        %1635 = vmatpush1.msra.mxu0 0.0
        %1636 = vmatprep.subr.mxu0 0.0
        %1637 = vmatpush1.msra.mxu0 0.0
        %1638 = vmatprep.subr.mxu0 0.0
        %1639 = vmatpush1.msra.mxu0 0.0
        %1640 = vmatprep.subr.mxu0 0.0
        %1641 = vmatpush1.msra.mxu0 0.0
        %1642 = vmatprep.subr.mxu0 0.0
        %1643 = vmatpush1.msra.mxu0 0.0
        %1644 = vmatprep.subr.mxu0 0.0
        %1645 = vmatpush1.msra.mxu0 0.0
        %1646 = vmatprep.subr.mxu0 0.0
        %1647 = vmatpush1.msra.mxu0 0.0
        %1648 = vmatprep.subr.mxu0 0.0
        %1649 = vmatpush1.msra.mxu0 0.0
        %1650 = vmatprep.subr.mxu0 0.0
        %1651 = vmatpush1.msra.mxu0 0.0
        %1652 = vmatprep.subr.mxu0 0.0
        %1653 = vmatpush1.msra.mxu0 0.0
        %1654 = vmatprep.subr.mxu0 0.0
        %1655 = vmatpush1.msra.mxu0 0.0
        %1656 = vmatprep.subr.mxu0 0.0
        %1657 = vmatpush1.msra.mxu0 0.0
        %1658 = vmatprep.subr.mxu0 0.0
        %1659 = vmatpush1.msra.mxu0 0.0
        %1660 = vmatprep.subr.mxu0 0.0
        %1661 = vmatpush1.msra.mxu0 0.0
        %1662 = vmatprep.subr.mxu0 0.0
        %1663 = vmatpush1.msra.mxu0 0.0
        %1664 = vmatprep.subr.mxu0 0.0
        %1665 = vmatpush1.msra.mxu0 0.0
        %1666 = vmatprep.subr.mxu0 0.0
        %1667 = vmatpush1.msra.mxu0 0.0
        %1668 = vmatprep.mubr.f32.mxu0 0.0
        %v1669 = vand.u32 %v1424, 4294901760
        %v1670 = vsub.f32 %v1424, %v1669
        %1671 = vmatmul.mubr.f32.gmra.mrb[0].mxu0 %v1670
        %v1672 = vpop.f32.mrb[0].mxu0
        %v1673 = vadd.f32 %v1593, %v1672
        %v1674 = vpop.f32.mrb[0].mxu0
        %1675 = vdwg.mxu0
        %1676 = vmatprep.subr.mxu0 0.0
        %v1677 = vand.u32 %v1411, 4294901760
        %1678 = vmatpush1.msra.mxu0 %v1677
        %1679 = vmatprep.subr.mxu0 0.0
        %v1680 = vand.u32 %v1412, 4294901760
        %1681 = vmatpush1.msra.mxu0 %v1680
        %1682 = vmatprep.subr.mxu0 0.0
        %v1683 = vand.u32 %v1413, 4294901760
        %1684 = vmatpush1.msra.mxu0 %v1683
        %1685 = vmatprep.subr.mxu0 0.0
        %v1686 = vand.u32 %v1414, 4294901760
        %1687 = vmatpush1.msra.mxu0 %v1686
        %1688 = vmatprep.subr.mxu0 0.0
        %1689 = vmatpush1.msra.mxu0 0.0
        %1690 = vmatprep.subr.mxu0 0.0
        %1691 = vmatpush1.msra.mxu0 0.0
        %1692 = vmatprep.subr.mxu0 0.0
        %1693 = vmatpush1.msra.mxu0 0.0
        %1694 = vmatprep.subr.mxu0 0.0
        %1695 = vmatpush1.msra.mxu0 0.0
        %1696 = vmatprep.subr.mxu0 0.0
        %1697 = vmatpush1.msra.mxu0 0.0
        %1698 = vmatprep.subr.mxu0 0.0
        %1699 = vmatpush1.msra.mxu0 0.0
        %1700 = vmatprep.subr.mxu0 0.0
        %1701 = vmatpush1.msra.mxu0 0.0
        %1702 = vmatprep.subr.mxu0 0.0
        %1703 = vmatpush1.msra.mxu0 0.0
        %1704 = vmatprep.subr.mxu0 0.0
        %1705 = vmatpush1.msra.mxu0 0.0
        %1706 = vmatprep.subr.mxu0 0.0
        %1707 = vmatpush1.msra.mxu0 0.0
        %1708 = vmatprep.subr.mxu0 0.0
        %1709 = vmatpush1.msra.mxu0 0.0
        %1710 = vmatprep.subr.mxu0 0.0
        %1711 = vmatpush1.msra.mxu0 0.0
        %1712 = vmatprep.subr.mxu0 0.0
        %1713 = vmatpush1.msra.mxu0 0.0
        %1714 = vmatprep.subr.mxu0 0.0
        %1715 = vmatpush1.msra.mxu0 0.0
        %1716 = vmatprep.subr.mxu0 0.0
        %1717 = vmatpush1.msra.mxu0 0.0
        %1718 = vmatprep.subr.mxu0 0.0
        %1719 = vmatpush1.msra.mxu0 0.0
        %1720 = vmatprep.subr.mxu0 0.0
        %1721 = vmatpush1.msra.mxu0 0.0
        %1722 = vmatprep.subr.mxu0 0.0
        %1723 = vmatpush1.msra.mxu0 0.0
        %1724 = vmatprep.subr.mxu0 0.0
        %1725 = vmatpush1.msra.mxu0 0.0
        %1726 = vmatprep.subr.mxu0 0.0
        %1727 = vmatpush1.msra.mxu0 0.0
        %1728 = vmatprep.subr.mxu0 0.0
        %1729 = vmatpush1.msra.mxu0 0.0
        %1730 = vmatprep.subr.mxu0 0.0
        %1731 = vmatpush1.msra.mxu0 0.0
        %1732 = vmatprep.subr.mxu0 0.0
        %1733 = vmatpush1.msra.mxu0 0.0
        %1734 = vmatprep.subr.mxu0 0.0
        %1735 = vmatpush1.msra.mxu0 0.0
        %1736 = vmatprep.subr.mxu0 0.0
        %1737 = vmatpush1.msra.mxu0 0.0
        %1738 = vmatprep.subr.mxu0 0.0
        %1739 = vmatpush1.msra.mxu0 0.0
        %1740 = vmatprep.subr.mxu0 0.0
        %1741 = vmatpush1.msra.mxu0 0.0
        %1742 = vmatprep.subr.mxu0 0.0
        %1743 = vmatpush1.msra.mxu0 0.0
        %1744 = vmatprep.mubr.f32.mxu0 0.0
        %v1745 = vand.u32 %v1424, 4294901760
        %v1746 = vsub.f32 %v1424, %v1745
        %v1747 = vand.u32 %v1746, 4294901760
        %1748 = vmatmul.mubr.f32.gmra.mrb[0].mxu0 %v1747
        %v1749 = vpop.f32.mrb[0].mxu0
        %v1750 = vadd.f32 %v1673, %v1749
        %v1751 = vpop.f32.mrb[0].mxu0
        %1752 = vdwg.mxu0
        %1753 = vmatprep.subr.mxu0 0.0
        %v1754 = vand.u32 %v1411, 4294901760
        %v1755 = vsub.f32 %v1411, %v1754
        %v1756 = vand.u32 %v1755, 4294901760
        %1757 = vmatpush1.msra.mxu0 %v1756
        %1758 = vmatprep.subr.mxu0 0.0
        %v1759 = vand.u32 %v1412, 4294901760
        %v1760 = vsub.f32 %v1412, %v1759
        %v1761 = vand.u32 %v1760, 4294901760
        %1762 = vmatpush1.msra.mxu0 %v1761
        %1763 = vmatprep.subr.mxu0 0.0
        %v1764 = vand.u32 %v1413, 4294901760
        %v1765 = vsub.f32 %v1413, %v1764
        %v1766 = vand.u32 %v1765, 4294901760
        %1767 = vmatpush1.msra.mxu0 %v1766
        %1768 = vmatprep.subr.mxu0 0.0
        %v1769 = vand.u32 %v1414, 4294901760
        %v1770 = vsub.f32 %v1414, %v1769
        %v1771 = vand.u32 %v1770, 4294901760
        %1772 = vmatpush1.msra.mxu0 %v1771
        %1773 = vmatprep.subr.mxu0 0.0
        %1774 = vmatpush1.msra.mxu0 0.0
        %1775 = vmatprep.subr.mxu0 0.0
        %1776 = vmatpush1.msra.mxu0 0.0
        %1777 = vmatprep.subr.mxu0 0.0
        %1778 = vmatpush1.msra.mxu0 0.0
        %1779 = vmatprep.subr.mxu0 0.0
        %1780 = vmatpush1.msra.mxu0 0.0
        %1781 = vmatprep.subr.mxu0 0.0
        %1782 = vmatpush1.msra.mxu0 0.0
        %1783 = vmatprep.subr.mxu0 0.0
        %1784 = vmatpush1.msra.mxu0 0.0
        %1785 = vmatprep.subr.mxu0 0.0
        %1786 = vmatpush1.msra.mxu0 0.0
        %1787 = vmatprep.subr.mxu0 0.0
        %1788 = vmatpush1.msra.mxu0 0.0
        %1789 = vmatprep.subr.mxu0 0.0
        %1790 = vmatpush1.msra.mxu0 0.0
        %1791 = vmatprep.subr.mxu0 0.0
        %1792 = vmatpush1.msra.mxu0 0.0
        %1793 = vmatprep.subr.mxu0 0.0
        %1794 = vmatpush1.msra.mxu0 0.0
        %1795 = vmatprep.subr.mxu0 0.0
        %1796 = vmatpush1.msra.mxu0 0.0
        %1797 = vmatprep.subr.mxu0 0.0
        %1798 = vmatpush1.msra.mxu0 0.0
        %1799 = vmatprep.subr.mxu0 0.0
        %1800 = vmatpush1.msra.mxu0 0.0
        %1801 = vmatprep.subr.mxu0 0.0
        %1802 = vmatpush1.msra.mxu0 0.0
        %1803 = vmatprep.subr.mxu0 0.0
        %1804 = vmatpush1.msra.mxu0 0.0
        %1805 = vmatprep.subr.mxu0 0.0
        %1806 = vmatpush1.msra.mxu0 0.0
        %1807 = vmatprep.subr.mxu0 0.0
        %1808 = vmatpush1.msra.mxu0 0.0
        %1809 = vmatprep.subr.mxu0 0.0
        %1810 = vmatpush1.msra.mxu0 0.0
        %1811 = vmatprep.subr.mxu0 0.0
        %1812 = vmatpush1.msra.mxu0 0.0
        %1813 = vmatprep.subr.mxu0 0.0
        %1814 = vmatpush1.msra.mxu0 0.0
        %1815 = vmatprep.subr.mxu0 0.0
        %1816 = vmatpush1.msra.mxu0 0.0
        %1817 = vmatprep.subr.mxu0 0.0
        %1818 = vmatpush1.msra.mxu0 0.0
        %1819 = vmatprep.subr.mxu0 0.0
        %1820 = vmatpush1.msra.mxu0 0.0
        %1821 = vmatprep.subr.mxu0 0.0
        %1822 = vmatpush1.msra.mxu0 0.0
        %1823 = vmatprep.subr.mxu0 0.0
        %1824 = vmatpush1.msra.mxu0 0.0
        %1825 = vmatprep.subr.mxu0 0.0
        %1826 = vmatpush1.msra.mxu0 0.0
        %1827 = vmatprep.subr.mxu0 0.0
        %1828 = vmatpush1.msra.mxu0 0.0
        %1829 = vmatprep.mubr.f32.mxu0 0.0
        %v1830 = vand.u32 %v1424, 4294901760
        %1831 = vmatmul.mubr.f32.gmra.mrb[0].mxu0 %v1830
        %v1832 = vpop.f32.mrb[0].mxu0
        %v1833 = vadd.f32 %v1750, %v1832
        %v1834 = vpop.f32.mrb[0].mxu0
        %1835 = vdwg.mxu0
        %1836 = vmatprep.subr.mxu0 0.0
        %v1837 = vand.u32 %v1411, 4294901760
        %1838 = vmatpush1.msra.mxu0 %v1837
        %1839 = vmatprep.subr.mxu0 0.0
        %v1840 = vand.u32 %v1412, 4294901760
        %1841 = vmatpush1.msra.mxu0 %v1840
        %1842 = vmatprep.subr.mxu0 0.0
        %v1843 = vand.u32 %v1413, 4294901760
        %1844 = vmatpush1.msra.mxu0 %v1843
        %1845 = vmatprep.subr.mxu0 0.0
        %v1846 = vand.u32 %v1414, 4294901760
        %1847 = vmatpush1.msra.mxu0 %v1846
        %1848 = vmatprep.subr.mxu0 0.0
        %1849 = vmatpush1.msra.mxu0 0.0
        %1850 = vmatprep.subr.mxu0 0.0
        %1851 = vmatpush1.msra.mxu0 0.0
        %1852 = vmatprep.subr.mxu0 0.0
        %1853 = vmatpush1.msra.mxu0 0.0
        %1854 = vmatprep.subr.mxu0 0.0
        %1855 = vmatpush1.msra.mxu0 0.0
        %1856 = vmatprep.subr.mxu0 0.0
        %1857 = vmatpush1.msra.mxu0 0.0
        %1858 = vmatprep.subr.mxu0 0.0
        %1859 = vmatpush1.msra.mxu0 0.0
        %1860 = vmatprep.subr.mxu0 0.0
        %1861 = vmatpush1.msra.mxu0 0.0
        %1862 = vmatprep.subr.mxu0 0.0
        %1863 = vmatpush1.msra.mxu0 0.0
        %1864 = vmatprep.subr.mxu0 0.0
        %1865 = vmatpush1.msra.mxu0 0.0
        %1866 = vmatprep.subr.mxu0 0.0
        %1867 = vmatpush1.msra.mxu0 0.0
        %1868 = vmatprep.subr.mxu0 0.0
        %1869 = vmatpush1.msra.mxu0 0.0
        %1870 = vmatprep.subr.mxu0 0.0
        %1871 = vmatpush1.msra.mxu0 0.0
        %1872 = vmatprep.subr.mxu0 0.0
        %1873 = vmatpush1.msra.mxu0 0.0
        %1874 = vmatprep.subr.mxu0 0.0
        %1875 = vmatpush1.msra.mxu0 0.0
        %1876 = vmatprep.subr.mxu0 0.0
        %1877 = vmatpush1.msra.mxu0 0.0
        %1878 = vmatprep.subr.mxu0 0.0
        %1879 = vmatpush1.msra.mxu0 0.0
        %1880 = vmatprep.subr.mxu0 0.0
        %1881 = vmatpush1.msra.mxu0 0.0
        %1882 = vmatprep.subr.mxu0 0.0
        %1883 = vmatpush1.msra.mxu0 0.0
        %1884 = vmatprep.subr.mxu0 0.0
        %1885 = vmatpush1.msra.mxu0 0.0
        %1886 = vmatprep.subr.mxu0 0.0
        %1887 = vmatpush1.msra.mxu0 0.0
        %1888 = vmatprep.subr.mxu0 0.0
        %1889 = vmatpush1.msra.mxu0 0.0
        %1890 = vmatprep.subr.mxu0 0.0
        %1891 = vmatpush1.msra.mxu0 0.0
        %1892 = vmatprep.subr.mxu0 0.0
        %1893 = vmatpush1.msra.mxu0 0.0
        %1894 = vmatprep.subr.mxu0 0.0
        %1895 = vmatpush1.msra.mxu0 0.0
        %1896 = vmatprep.subr.mxu0 0.0
        %1897 = vmatpush1.msra.mxu0 0.0
        %1898 = vmatprep.subr.mxu0 0.0
        %1899 = vmatpush1.msra.mxu0 0.0
        %1900 = vmatprep.subr.mxu0 0.0
        %1901 = vmatpush1.msra.mxu0 0.0
        %1902 = vmatprep.subr.mxu0 0.0
        %1903 = vmatpush1.msra.mxu0 0.0
        %1904 = vmatprep.mubr.f32.mxu0 0.0
        %v1905 = vand.u32 %v1424, 4294901760
        %1906 = vmatmul.mubr.f32.gmra.mrb[0].mxu0 %v1905
        %v1907 = vpop.f32.mrb[0].mxu0
        %v1908 = vadd.f32 %v1833, %v1907
        %v1909 = vpop.f32.mrb[0].mxu0
        %1910 = vdwg.mxu0
        %1911 = vst [vmem:[%s359] sm:$0x3] %v1908
        %s1912 = sand.u32 %s190, 1
        %s1913 = scalar_lea.sflag [#allocation6], %s1912
        %s1914 = sand.u32 %s190, 1
        %s1915 = smul.addr %s1914, 2
        %s1916 = scalar_lea.vmem [#allocation12], %s1915
        // Predicated region
        $region69: #{tpu_custom_call.1} parent=43 // pred_check
          %p1917 = pneg %p200
        $region70: #{tpu_custom_call.1} parent=43 // pred_check_branch
          %1919 = sbr.rel (%p1917) target = $region72
        $region71: #{tpu_custom_call.1} parent=43 // pred_region
          %s1921 = ssub.s32 32, 32
          %1922 = vsyncadd %s1913, %s1921
          %s1923 = smul.addr %s31, 2
          %s1924 = sadd.s32 %s32, %s1923
          %s1925 = smul.addr %s1924, 32
          %s1926 = scalar_lea.hbm %s6, %s1925
          %s1928 = sshll.u32 %s1916, 4
          %s1929 = int_to_ptr.vmem [resolvable:$true] %s1928
          %1931 = dma.vmem_to_hbm [thread:$0]  %s1929, 32, %s1926, %s1913
        $region72: #{tpu_custom_call.1} parent=43 // pred_fallthru
          _
      $region44: #{tpu_custom_call.1} parent=5 // pred_fallthru
        _
      %p1932 = scmp.le.s32.totalorder 2, %s22
      // Predicated region
      $region73: #{tpu_custom_call.1} parent=5 // pred_check
        %p1933 = pneg %p1932
      $region74: #{tpu_custom_call.1} parent=5 // pred_check_branch
        %1935 = sbr.rel (%p1933) target = $region76
      $region75: #{tpu_custom_call.1} parent=5 // pred_region
        %s1936 = ssub.s32 %s22, 2
        // Predicated region
        $region77: #{tpu_custom_call.1} parent=75 // pred_check
          %p1937 = pneg %p206
        $region78: #{tpu_custom_call.1} parent=75 // pred_check_branch
          %1939 = sbr.rel (%p1937) target = $region80
        $region79: #{tpu_custom_call.1} parent=75 // pred_region
          %s1940 = sand.u32 %s191, 1
          %s1941 = scalar_lea.sflag [#allocation6], %s1940
          %s1942 = sand.u32 %s191, 1
          %s1943 = smul.addr %s1942, 2
          %s1944 = scalar_lea.vmem [#allocation12], %s1943
          %1945 = dma.done %s1941, 32
        $region80: #{tpu_custom_call.1} parent=75 // pred_fallthru
          _
      $region76: #{tpu_custom_call.1} parent=5 // pred_fallthru
        _
    $region6: #{tpu_custom_call.1} parent=1 // loop_footer
      %s26 = sadd.s32 1, %s22
    $region7: #{tpu_custom_call.1} parent=1 // loop_footer_branch
      %21 = sbr.rel target = $region3
    $region8: #{tpu_custom_call.1} parent=1 // loop_exit
      _
    %1946 = vsyncpa [#allocation5], 1
    %s1947 = scalar_lea.sflag [#allocation5], 1
    %1948 = vsyncpa %s1947, 1
    %1949 = vsyncpa [#allocation8], 1
    %1950 = vsyncpa [#allocation11], 1
    %s1951 = scalar_lea.sflag [#allocation11], 1
    %1952 = vsyncpa %s1951, 1
    %1953 = vsyncpa [#allocation6], 1
    %s1954 = scalar_lea.sflag [#allocation6], 1
    %1955 = vsyncpa %s1954, 1

</llo_original>
